<compile_context>
chip_gen: v7x
topology: tpu7x:2x2x1
jax: 0.10.0
libtpu: 0.0.40
codegen_flags: <defaults>
</compile_context>

<pallas_src>
import functools
import math

import jax
import jax.numpy as jnp
from jax import lax
from jax.experimental import pallas as pl
from jax.experimental.pallas import tpu as pltpu


def _vit_attention_kernel(num_heads, head_dim,
                          x_ref, wq_ref, bq_ref, wk_ref, bk_ref,
                          wv_ref, bv_ref, wo_ref, bo_ref, o_ref):
    """One grid step = one batch element. All tiles live fully in VMEM."""
    x = x_ref[0].astype(jnp.bfloat16)          # (S, H)
    S, H = x.shape

    # QKV projections: bf16 operands, f32 accumulation. The 1/sqrt(head_dim)
    # attention scale is pre-folded into wq/bq by the wrapper.
    q = (jnp.dot(x, wq_ref[...], preferred_element_type=jnp.float32)
         + bq_ref[0]).astype(jnp.bfloat16)
    k = (jnp.dot(x, wk_ref[...], preferred_element_type=jnp.float32)
         + bk_ref[0]).astype(jnp.bfloat16)
    v = (jnp.dot(x, wv_ref[...], preferred_element_type=jnp.float32)
         + bv_ref[0]).astype(jnp.bfloat16)

    # Per-head attention with per-head output-projection accumulation
    # (no lane-dim concatenate; num_heads is small and static, loop unrolls).
    acc = jnp.zeros((S, H), jnp.float32)
    for h in range(num_heads):
        sl = slice(h * head_dim, (h + 1) * head_dim)
        qh = q[:, sl]                              # (S, D) bf16 (pre-scaled)
        kh = k[:, sl]                              # (S, D) bf16
        vh = v[:, sl]                              # (S, D) bf16

        # scores = qh @ kh.T with f32 accumulation.
        scores = lax.dot_general(qh, kh, (((1,), (1,)), ((), ())),
                                 preferred_element_type=jnp.float32)  # (S, S)
        scores = scores - jnp.max(scores, axis=-1, keepdims=True)
        probs = jnp.exp(scores)                                       # f32, EUP
        probs = probs * pl.reciprocal(
            jnp.sum(probs, axis=-1, keepdims=True), approx=True)
        # TODO(synk): attention_probs dropout omitted (identity in eval mode).

        ctx_h = jnp.dot(probs.astype(jnp.bfloat16), vh,
                        preferred_element_type=jnp.float32)           # (S, D)

        # Output projection accumulated per head; wo row-slice is a cheap
        # sublane slice at a multiple of head_dim.
        acc = acc + jnp.dot(ctx_h.astype(jnp.bfloat16), wo_ref[sl, :],
                            preferred_element_type=jnp.float32)       # (S, H)

    # ViTSelfOutput.dense bias; hidden dropout is identity in eval mode.
    o_ref[0] = (acc + bo_ref[0]).astype(o_ref.dtype)


def vit_attention(x, wq, bq, wk, bk, wv, bv, wo, bo, *, num_heads):
    """x: (B, S, H). Weights w*: (H, H) in (in, out) layout. Biases b*: (H,)."""
    B, S, H = x.shape
    head_dim = H // num_heads
    scale = 1.0 / math.sqrt(head_dim)

    # Fold attention scale into the query projection; cast weights to bf16
    # (MXU-native operands, halved HBM->VMEM traffic). Biases stay f32.
    wq_b = (wq * scale).astype(jnp.bfloat16)
    wk_b = wk.astype(jnp.bfloat16)
    wv_b = wv.astype(jnp.bfloat16)
    wo_b = wo.astype(jnp.bfloat16)
    bq2 = (bq * scale).reshape(1, H).astype(jnp.float32)
    bk2 = bk.reshape(1, H).astype(jnp.float32)
    bv2 = bv.reshape(1, H).astype(jnp.float32)
    bo2 = bo.reshape(1, H).astype(jnp.float32)

    w_spec = pl.BlockSpec((H, H), lambda b: (0, 0))   # resident, DMA'd once
    b_spec = pl.BlockSpec((1, H), lambda b: (0, 0))
    x_spec = pl.BlockSpec((1, S, H), lambda b: (b, 0, 0))

    kernel = functools.partial(_vit_attention_kernel, num_heads, head_dim)

    # Advisory cost estimate for XLA's scheduler around the custom call.
    flops = 2 * B * (4 * S * H * H + 2 * num_heads * S * S * head_dim)
    transcendentals = B * num_heads * S * S
    bytes_accessed = (4 * H * H * 2 + 4 * H * 4
                      + 2 * B * S * H * x.dtype.itemsize)

    return pl.pallas_call(
        kernel,
        out_shape=jax.ShapeDtypeStruct((B, S, H), x.dtype),
        grid_spec=pltpu.PrefetchScalarGridSpec(
            num_scalar_prefetch=0,
            grid=(B,),
            in_specs=[x_spec,
                      w_spec, b_spec,   # query (scale folded in)
                      w_spec, b_spec,   # key
                      w_spec, b_spec,   # value
                      w_spec, b_spec],  # output dense
            out_specs=x_spec,
        ),
        compiler_params=pltpu.CompilerParams(
            dimension_semantics=("parallel",),
            vmem_limit_bytes=64 * 1024 * 1024),
        cost_estimate=pl.CostEstimate(
            flops=flops, transcendentals=transcendentals,
            bytes_accessed=bytes_accessed),
    )(x, wq_b, bq2, wk_b, bk2, wv_b, bv2, wo_b, bo2)


def _reference(x, wq, bq, wk, bk, wv, bv, wo, bo, *, num_heads):
    """Plain-JAX (f32) reference mirroring the PyTorch forward (eval mode)."""
    B, S, H = x.shape
    D = H // num_heads

    def proj(w, b):
        return (x @ w + b).reshape(B, S, num_heads, D).transpose(0, 2, 1, 3)

    q, k, v = proj(wq, bq), proj(wk, bk), proj(wv, bv)
    scores = jnp.einsum("bhqd,bhkd->bhqk", q, k) / math.sqrt(D)
    probs = jax.nn.softmax(scores, axis=-1)
    ctx = jnp.einsum("bhqk,bhkd->bhqd", probs, v)
    ctx = ctx.transpose(0, 2, 1, 3).reshape(B, S, H)
    return ctx @ wo + bo


if __name__ == "__main__":
    B, S, H = 2, 8, 32
    num_heads = 4

    key = jax.random.PRNGKey(0)
    keys = jax.random.split(key, 9)
    bound = 1.0 / math.sqrt(H)  # nn.Linear default init range

    x = jax.random.normal(keys[0], (B, S, H), dtype=jnp.float32)
    # PyTorch stores Linear weight as (out, in); we pass (in, out) = W.T.
    wq = jax.random.uniform(keys[1], (H, H), jnp.float32, -bound, bound)
    wk = jax.random.uniform(keys[2], (H, H), jnp.float32, -bound, bound)
    wv = jax.random.uniform(keys[3], (H, H), jnp.float32, -bound, bound)
    wo = jax.random.uniform(keys[4], (H, H), jnp.float32, -bound, bound)
    bq = jax.random.uniform(keys[5], (H,), jnp.float32, -bound, bound)
    bk = jax.random.uniform(keys[6], (H,), jnp.float32, -bound, bound)
    bv = jax.random.uniform(keys[7], (H,), jnp.float32, -bound, bound)
    bo = jax.random.uniform(keys[8], (H,), jnp.float32, -bound, bound)

    out = vit_attention(x, wq, bq, wk, bk, wv, bv, wo, bo, num_heads=num_heads)
    out = jax.block_until_ready(out)

    ref = _reference(x, wq, bq, wk, bk, wv, bv, wo, bo, num_heads=num_heads)
    assert out.shape == (B, S, H)
    # bf16 matmul operands (f32 accumulation) => loosened tolerance vs f32 ref.
    assert jnp.allclose(out, ref, atol=3e-2, rtol=3e-2)

    print("KERNEL_OK")
</pallas_src>

<mosaic_0001>
module attributes {stable_mosaic.version = 11 : i64} {
  func.func @_vit_attention_kernel(%arg0: i32, %arg1: memref<1x8x32xf32, #tpu.memory_space<vmem>>, %arg2: memref<32x32xbf16, #tpu.memory_space<vmem>>, %arg3: memref<1x32xf32, #tpu.memory_space<vmem>>, %arg4: memref<32x32xbf16, #tpu.memory_space<vmem>>, %arg5: memref<1x32xf32, #tpu.memory_space<vmem>>, %arg6: memref<32x32xbf16, #tpu.memory_space<vmem>>, %arg7: memref<1x32xf32, #tpu.memory_space<vmem>>, %arg8: memref<32x32xbf16, #tpu.memory_space<vmem>>, %arg9: memref<1x32xf32, #tpu.memory_space<vmem>>, %arg10: memref<1x8x32xf32, #tpu.memory_space<vmem>>) attributes {dimension_semantics = [#tpu.dimension_semantics<parallel>], iteration_bounds = array<i64: 2>, scalar_prefetch = 0 : i64, scratch_operands = 0 : i64, tpu.core_type = #tpu.core_type<tc>, window_params = [{transform_indices = @transform_0, window_bounds = array<i64: 1, 8, 32>}, {pipeline_mode = #tpu.pipeline_mode<synchronous>, transform_indices = @transform_1, window_bounds = array<i64: 32, 32>}, {pipeline_mode = #tpu.pipeline_mode<synchronous>, transform_indices = @transform_2, window_bounds = array<i64: 1, 32>}, {pipeline_mode = #tpu.pipeline_mode<synchronous>, transform_indices = @transform_3, window_bounds = array<i64: 32, 32>}, {pipeline_mode = #tpu.pipeline_mode<synchronous>, transform_indices = @transform_4, window_bounds = array<i64: 1, 32>}, {pipeline_mode = #tpu.pipeline_mode<synchronous>, transform_indices = @transform_5, window_bounds = array<i64: 32, 32>}, {pipeline_mode = #tpu.pipeline_mode<synchronous>, transform_indices = @transform_6, window_bounds = array<i64: 1, 32>}, {pipeline_mode = #tpu.pipeline_mode<synchronous>, transform_indices = @transform_7, window_bounds = array<i64: 32, 32>}, {pipeline_mode = #tpu.pipeline_mode<synchronous>, transform_indices = @transform_8, window_bounds = array<i64: 1, 32>}, {transform_indices = @transform_9, window_bounds = array<i64: 1, 8, 32>}]} {
    %c0 = arith.constant 0 : index
    %c0_0 = arith.constant 0 : index
    %c0_1 = arith.constant 0 : index
    %0 = vector.load %arg1[%c0, %c0_0, %c0_1] : memref<1x8x32xf32, #tpu.memory_space<vmem>>, vector<1x8x32xf32>
    %1 = vector.shape_cast %0 : vector<1x8x32xf32> to vector<8x32xf32>
    %2 = arith.truncf %1 : vector<8x32xf32> to vector<8x32xbf16>
    %c0_2 = arith.constant 0 : index
    %c0_3 = arith.constant 0 : index
    %3 = vector.load %arg2[%c0_2, %c0_3] : memref<32x32xbf16, #tpu.memory_space<vmem>>, vector<32x32xbf16>
    %cst = arith.constant dense<0.000000e+00> : vector<8x32xf32>
    %4 = tpu.matmul %2, %3, %cst {dimension_numbers = #tpu.dot_dimension_numbers<[1], [0], [0], [1], [0, 0, 1, 1], [], []>} : vector<8x32xbf16>, vector<32x32xbf16>, vector<8x32xf32> -> vector<8x32xf32>
    %c0_4 = arith.constant 0 : index
    %c0_5 = arith.constant 0 : index
    %5 = vector.load %arg3[%c0_4, %c0_5] : memref<1x32xf32, #tpu.memory_space<vmem>>, vector<1x32xf32>
    %6 = vector.shape_cast %5 : vector<1x32xf32> to vector<32xf32>
    %7 = vector.shape_cast %6 : vector<32xf32> to vector<1x32xf32>
    %8 = vector.broadcast %7 : vector<1x32xf32> to vector<8x32xf32>
    %9 = arith.addf %4, %8 : vector<8x32xf32>
    %10 = arith.truncf %9 : vector<8x32xf32> to vector<8x32xbf16>
    %c0_6 = arith.constant 0 : index
    %c0_7 = arith.constant 0 : index
    %11 = vector.load %arg4[%c0_6, %c0_7] : memref<32x32xbf16, #tpu.memory_space<vmem>>, vector<32x32xbf16>
    %cst_8 = arith.constant dense<0.000000e+00> : vector<8x32xf32>
    %12 = tpu.matmul %2, %11, %cst_8 {dimension_numbers = #tpu.dot_dimension_numbers<[1], [0], [0], [1], [0, 0, 1, 1], [], []>} : vector<8x32xbf16>, vector<32x32xbf16>, vector<8x32xf32> -> vector<8x32xf32>
    %c0_9 = arith.constant 0 : index
    %c0_10 = arith.constant 0 : index
    %13 = vector.load %arg5[%c0_9, %c0_10] : memref<1x32xf32, #tpu.memory_space<vmem>>, vector<1x32xf32>
    %14 = vector.shape_cast %13 : vector<1x32xf32> to vector<32xf32>
    %15 = vector.shape_cast %14 : vector<32xf32> to vector<1x32xf32>
    %16 = vector.broadcast %15 : vector<1x32xf32> to vector<8x32xf32>
    %17 = arith.addf %12, %16 : vector<8x32xf32>
    %18 = arith.truncf %17 : vector<8x32xf32> to vector<8x32xbf16>
    %c0_11 = arith.constant 0 : index
    %c0_12 = arith.constant 0 : index
    %19 = vector.load %arg6[%c0_11, %c0_12] : memref<32x32xbf16, #tpu.memory_space<vmem>>, vector<32x32xbf16>
    %cst_13 = arith.constant dense<0.000000e+00> : vector<8x32xf32>
    %20 = tpu.matmul %2, %19, %cst_13 {dimension_numbers = #tpu.dot_dimension_numbers<[1], [0], [0], [1], [0, 0, 1, 1], [], []>} : vector<8x32xbf16>, vector<32x32xbf16>, vector<8x32xf32> -> vector<8x32xf32>
    %c0_14 = arith.constant 0 : index
    %c0_15 = arith.constant 0 : index
    %21 = vector.load %arg7[%c0_14, %c0_15] : memref<1x32xf32, #tpu.memory_space<vmem>>, vector<1x32xf32>
    %22 = vector.shape_cast %21 : vector<1x32xf32> to vector<32xf32>
    %23 = vector.shape_cast %22 : vector<32xf32> to vector<1x32xf32>
    %24 = vector.broadcast %23 : vector<1x32xf32> to vector<8x32xf32>
    %25 = arith.addf %20, %24 : vector<8x32xf32>
    %26 = arith.truncf %25 : vector<8x32xf32> to vector<8x32xbf16>
    %cst_16 = arith.constant 0.000000e+00 : f32
    %27 = vector.broadcast %cst_16 : f32 to vector<8x32xf32>
    %28 = vector.extract_strided_slice %10 {offsets = [0, 0], sizes = [8, 8], strides = [1, 1]} : vector<8x32xbf16> to vector<8x8xbf16>
    %29 = vector.extract_strided_slice %18 {offsets = [0, 0], sizes = [8, 8], strides = [1, 1]} : vector<8x32xbf16> to vector<8x8xbf16>
    %30 = vector.extract_strided_slice %26 {offsets = [0, 0], sizes = [8, 8], strides = [1, 1]} : vector<8x32xbf16> to vector<8x8xbf16>
    %cst_17 = arith.constant dense<0.000000e+00> : vector<8x8xf32>
    %31 = tpu.matmul %28, %29, %cst_17 {dimension_numbers = #tpu.dot_dimension_numbers<[1], [1], [0], [0], [0, 0, 1, 0], [], []>} : vector<8x8xbf16>, vector<8x8xbf16>, vector<8x8xf32> -> vector<8x8xf32>
    %cst_18 = arith.constant dense<0xFF800000> : vector<8xf32>
    %32 = vector.multi_reduction <maximumf>, %31, %cst_18 [1] : vector<8x8xf32> to vector<8xf32>
    %33 = vector.shape_cast %32 : vector<8xf32> to vector<8x1xf32>
    %34 = vector.broadcast %33 : vector<8x1xf32> to vector<8x8xf32>
    %35 = arith.subf %31, %34 : vector<8x8xf32>
    %36 = math.exp %35 : vector<8x8xf32>
    %cst_19 = arith.constant dense<0.000000e+00> : vector<8xf32>
    %37 = vector.multi_reduction <add>, %36, %cst_19 [1] : vector<8x8xf32> to vector<8xf32>
    %38 = vector.shape_cast %37 : vector<8xf32> to vector<8x1xf32>
    %39 = tpu.reciprocal %38 {approx = true} : vector<8x1xf32> -> vector<8x1xf32>
    %40 = vector.broadcast %39 : vector<8x1xf32> to vector<8x8xf32>
    %41 = arith.mulf %36, %40 : vector<8x8xf32>
    %42 = arith.truncf %41 : vector<8x8xf32> to vector<8x8xbf16>
    %cst_20 = arith.constant dense<0.000000e+00> : vector<8x8xf32>
    %43 = tpu.matmul %42, %30, %cst_20 {dimension_numbers = #tpu.dot_dimension_numbers<[1], [0], [0], [1], [0, 0, 1, 1], [], []>} : vector<8x8xbf16>, vector<8x8xbf16>, vector<8x8xf32> -> vector<8x8xf32>
    %44 = arith.truncf %43 : vector<8x8xf32> to vector<8x8xbf16>
    %c0_21 = arith.constant 0 : index
    %c0_22 = arith.constant 0 : index
    %45 = vector.load %arg8[%c0_21, %c0_22] : memref<32x32xbf16, #tpu.memory_space<vmem>>, vector<8x32xbf16>
    %cst_23 = arith.constant dense<0.000000e+00> : vector<8x32xf32>
    %46 = tpu.matmul %44, %45, %cst_23 {dimension_numbers = #tpu.dot_dimension_numbers<[1], [0], [0], [1], [0, 0, 1, 1], [], []>} : vector<8x8xbf16>, vector<8x32xbf16>, vector<8x32xf32> -> vector<8x32xf32>
    %47 = arith.addf %27, %46 : vector<8x32xf32>
    %48 = vector.extract_strided_slice %10 {offsets = [0, 8], sizes = [8, 8], strides = [1, 1]} : vector<8x32xbf16> to vector<8x8xbf16>
    %49 = vector.extract_strided_slice %18 {offsets = [0, 8], sizes = [8, 8], strides = [1, 1]} : vector<8x32xbf16> to vector<8x8xbf16>
    %50 = vector.extract_strided_slice %26 {offsets = [0, 8], sizes = [8, 8], strides = [1, 1]} : vector<8x32xbf16> to vector<8x8xbf16>
    %cst_24 = arith.constant dense<0.000000e+00> : vector<8x8xf32>
    %51 = tpu.matmul %48, %49, %cst_24 {dimension_numbers = #tpu.dot_dimension_numbers<[1], [1], [0], [0], [0, 0, 1, 0], [], []>} : vector<8x8xbf16>, vector<8x8xbf16>, vector<8x8xf32> -> vector<8x8xf32>
    %cst_25 = arith.constant dense<0xFF800000> : vector<8xf32>
    %52 = vector.multi_reduction <maximumf>, %51, %cst_25 [1] : vector<8x8xf32> to vector<8xf32>
    %53 = vector.shape_cast %52 : vector<8xf32> to vector<8x1xf32>
    %54 = vector.broadcast %53 : vector<8x1xf32> to vector<8x8xf32>
    %55 = arith.subf %51, %54 : vector<8x8xf32>
    %56 = math.exp %55 : vector<8x8xf32>
    %cst_26 = arith.constant dense<0.000000e+00> : vector<8xf32>
    %57 = vector.multi_reduction <add>, %56, %cst_26 [1] : vector<8x8xf32> to vector<8xf32>
    %58 = vector.shape_cast %57 : vector<8xf32> to vector<8x1xf32>
    %59 = tpu.reciprocal %58 {approx = true} : vector<8x1xf32> -> vector<8x1xf32>
    %60 = vector.broadcast %59 : vector<8x1xf32> to vector<8x8xf32>
    %61 = arith.mulf %56, %60 : vector<8x8xf32>
    %62 = arith.truncf %61 : vector<8x8xf32> to vector<8x8xbf16>
    %cst_27 = arith.constant dense<0.000000e+00> : vector<8x8xf32>
    %63 = tpu.matmul %62, %50, %cst_27 {dimension_numbers = #tpu.dot_dimension_numbers<[1], [0], [0], [1], [0, 0, 1, 1], [], []>} : vector<8x8xbf16>, vector<8x8xbf16>, vector<8x8xf32> -> vector<8x8xf32>
    %64 = arith.truncf %63 : vector<8x8xf32> to vector<8x8xbf16>
    %c8 = arith.constant 8 : index
    %c0_28 = arith.constant 0 : index
    %65 = vector.load %arg8[%c8, %c0_28] : memref<32x32xbf16, #tpu.memory_space<vmem>>, vector<8x32xbf16>
    %cst_29 = arith.constant dense<0.000000e+00> : vector<8x32xf32>
    %66 = tpu.matmul %64, %65, %cst_29 {dimension_numbers = #tpu.dot_dimension_numbers<[1], [0], [0], [1], [0, 0, 1, 1], [], []>} : vector<8x8xbf16>, vector<8x32xbf16>, vector<8x32xf32> -> vector<8x32xf32>
    %67 = arith.addf %47, %66 : vector<8x32xf32>
    %68 = vector.extract_strided_slice %10 {offsets = [0, 16], sizes = [8, 8], strides = [1, 1]} : vector<8x32xbf16> to vector<8x8xbf16>
    %69 = vector.extract_strided_slice %18 {offsets = [0, 16], sizes = [8, 8], strides = [1, 1]} : vector<8x32xbf16> to vector<8x8xbf16>
    %70 = vector.extract_strided_slice %26 {offsets = [0, 16], sizes = [8, 8], strides = [1, 1]} : vector<8x32xbf16> to vector<8x8xbf16>
    %cst_30 = arith.constant dense<0.000000e+00> : vector<8x8xf32>
    %71 = tpu.matmul %68, %69, %cst_30 {dimension_numbers = #tpu.dot_dimension_numbers<[1], [1], [0], [0], [0, 0, 1, 0], [], []>} : vector<8x8xbf16>, vector<8x8xbf16>, vector<8x8xf32> -> vector<8x8xf32>
    %cst_31 = arith.constant dense<0xFF800000> : vector<8xf32>
    %72 = vector.multi_reduction <maximumf>, %71, %cst_31 [1] : vector<8x8xf32> to vector<8xf32>
    %73 = vector.shape_cast %72 : vector<8xf32> to vector<8x1xf32>
    %74 = vector.broadcast %73 : vector<8x1xf32> to vector<8x8xf32>
    %75 = arith.subf %71, %74 : vector<8x8xf32>
    %76 = math.exp %75 : vector<8x8xf32>
    %cst_32 = arith.constant dense<0.000000e+00> : vector<8xf32>
    %77 = vector.multi_reduction <add>, %76, %cst_32 [1] : vector<8x8xf32> to vector<8xf32>
    %78 = vector.shape_cast %77 : vector<8xf32> to vector<8x1xf32>
    %79 = tpu.reciprocal %78 {approx = true} : vector<8x1xf32> -> vector<8x1xf32>
    %80 = vector.broadcast %79 : vector<8x1xf32> to vector<8x8xf32>
    %81 = arith.mulf %76, %80 : vector<8x8xf32>
    %82 = arith.truncf %81 : vector<8x8xf32> to vector<8x8xbf16>
    %cst_33 = arith.constant dense<0.000000e+00> : vector<8x8xf32>
    %83 = tpu.matmul %82, %70, %cst_33 {dimension_numbers = #tpu.dot_dimension_numbers<[1], [0], [0], [1], [0, 0, 1, 1], [], []>} : vector<8x8xbf16>, vector<8x8xbf16>, vector<8x8xf32> -> vector<8x8xf32>
    %84 = arith.truncf %83 : vector<8x8xf32> to vector<8x8xbf16>
    %c16 = arith.constant 16 : index
    %c0_34 = arith.constant 0 : index
    %85 = vector.load %arg8[%c16, %c0_34] : memref<32x32xbf16, #tpu.memory_space<vmem>>, vector<8x32xbf16>
    %cst_35 = arith.constant dense<0.000000e+00> : vector<8x32xf32>
    %86 = tpu.matmul %84, %85, %cst_35 {dimension_numbers = #tpu.dot_dimension_numbers<[1], [0], [0], [1], [0, 0, 1, 1], [], []>} : vector<8x8xbf16>, vector<8x32xbf16>, vector<8x32xf32> -> vector<8x32xf32>
    %87 = arith.addf %67, %86 : vector<8x32xf32>
    %88 = vector.extract_strided_slice %10 {offsets = [0, 24], sizes = [8, 8], strides = [1, 1]} : vector<8x32xbf16> to vector<8x8xbf16>
    %89 = vector.extract_strided_slice %18 {offsets = [0, 24], sizes = [8, 8], strides = [1, 1]} : vector<8x32xbf16> to vector<8x8xbf16>
    %90 = vector.extract_strided_slice %26 {offsets = [0, 24], sizes = [8, 8], strides = [1, 1]} : vector<8x32xbf16> to vector<8x8xbf16>
    %cst_36 = arith.constant dense<0.000000e+00> : vector<8x8xf32>
    %91 = tpu.matmul %88, %89, %cst_36 {dimension_numbers = #tpu.dot_dimension_numbers<[1], [1], [0], [0], [0, 0, 1, 0], [], []>} : vector<8x8xbf16>, vector<8x8xbf16>, vector<8x8xf32> -> vector<8x8xf32>
    %cst_37 = arith.constant dense<0xFF800000> : vector<8xf32>
    %92 = vector.multi_reduction <maximumf>, %91, %cst_37 [1] : vector<8x8xf32> to vector<8xf32>
    %93 = vector.shape_cast %92 : vector<8xf32> to vector<8x1xf32>
    %94 = vector.broadcast %93 : vector<8x1xf32> to vector<8x8xf32>
    %95 = arith.subf %91, %94 : vector<8x8xf32>
    %96 = math.exp %95 : vector<8x8xf32>
    %cst_38 = arith.constant dense<0.000000e+00> : vector<8xf32>
    %97 = vector.multi_reduction <add>, %96, %cst_38 [1] : vector<8x8xf32> to vector<8xf32>
    %98 = vector.shape_cast %97 : vector<8xf32> to vector<8x1xf32>
    %99 = tpu.reciprocal %98 {approx = true} : vector<8x1xf32> -> vector<8x1xf32>
    %100 = vector.broadcast %99 : vector<8x1xf32> to vector<8x8xf32>
    %101 = arith.mulf %96, %100 : vector<8x8xf32>
    %102 = arith.truncf %101 : vector<8x8xf32> to vector<8x8xbf16>
    %cst_39 = arith.constant dense<0.000000e+00> : vector<8x8xf32>
    %103 = tpu.matmul %102, %90, %cst_39 {dimension_numbers = #tpu.dot_dimension_numbers<[1], [0], [0], [1], [0, 0, 1, 1], [], []>} : vector<8x8xbf16>, vector<8x8xbf16>, vector<8x8xf32> -> vector<8x8xf32>
    %104 = arith.truncf %103 : vector<8x8xf32> to vector<8x8xbf16>
    %c24 = arith.constant 24 : index
    %c0_40 = arith.constant 0 : index
    %105 = vector.load %arg8[%c24, %c0_40] : memref<32x32xbf16, #tpu.memory_space<vmem>>, vector<8x32xbf16>
    %cst_41 = arith.constant dense<0.000000e+00> : vector<8x32xf32>
    %106 = tpu.matmul %104, %105, %cst_41 {dimension_numbers = #tpu.dot_dimension_numbers<[1], [0], [0], [1], [0, 0, 1, 1], [], []>} : vector<8x8xbf16>, vector<8x32xbf16>, vector<8x32xf32> -> vector<8x32xf32>
    %107 = arith.addf %87, %106 : vector<8x32xf32>
    %c0_42 = arith.constant 0 : index
    %c0_43 = arith.constant 0 : index
    %108 = vector.load %arg9[%c0_42, %c0_43] : memref<1x32xf32, #tpu.memory_space<vmem>>, vector<1x32xf32>
    %109 = vector.shape_cast %108 : vector<1x32xf32> to vector<32xf32>
    %110 = vector.shape_cast %109 : vector<32xf32> to vector<1x32xf32>
    %111 = vector.broadcast %110 : vector<1x32xf32> to vector<8x32xf32>
    %112 = arith.addf %107, %111 : vector<8x32xf32>
    %c0_44 = arith.constant 0 : index
    %c0_45 = arith.constant 0 : index
    %c0_46 = arith.constant 0 : index
    %113 = vector.load %arg10[%c0_44, %c0_45, %c0_46] : memref<1x8x32xf32, #tpu.memory_space<vmem>>, vector<1x8x32xf32>
    %114 = vector.shape_cast %113 : vector<1x8x32xf32> to vector<8x32xf32>
    %115 = vector.shape_cast %112 : vector<8x32xf32> to vector<1x8x32xf32>
    tpu.vector_store %arg10[%c0_44, %c0_45, %c0_46], %115 {strides = array<i32>} : memref<1x8x32xf32, #tpu.memory_space<vmem>>, vector<1x8x32xf32>,
    return
  }
  func.func @transform_0(%arg0: i32) -> (i32, i32, i32) {
    %c0_i32 = arith.constant 0 : i32
    %c0_i32_0 = arith.constant 0 : i32
    %c0_i32_1 = arith.constant 0 : i32
    return %arg0, %c0_i32, %c0_i32_0 : i32, i32, i32
  }
  func.func @transform_1(%arg0: i32) -> (i32, i32) {
    %c0_i32 = arith.constant 0 : i32
    %c0_i32_0 = arith.constant 0 : i32
    %c0_i32_1 = arith.constant 0 : i32
    return %c0_i32, %c0_i32_0 : i32, i32
  }
  func.func @transform_2(%arg0: i32) -> (i32, i32) {
    %c0_i32 = arith.constant 0 : i32
    %c0_i32_0 = arith.constant 0 : i32
    %c0_i32_1 = arith.constant 0 : i32
    return %c0_i32, %c0_i32_0 : i32, i32
  }
  func.func @transform_3(%arg0: i32) -> (i32, i32) {
    %c0_i32 = arith.constant 0 : i32
    %c0_i32_0 = arith.constant 0 : i32
    %c0_i32_1 = arith.constant 0 : i32
    return %c0_i32, %c0_i32_0 : i32, i32
  }
  func.func @transform_4(%arg0: i32) -> (i32, i32) {
    %c0_i32 = arith.constant 0 : i32
    %c0_i32_0 = arith.constant 0 : i32
    %c0_i32_1 = arith.constant 0 : i32
    return %c0_i32, %c0_i32_0 : i32, i32
  }
  func.func @transform_5(%arg0: i32) -> (i32, i32) {
    %c0_i32 = arith.constant 0 : i32
    %c0_i32_0 = arith.constant 0 : i32
    %c0_i32_1 = arith.constant 0 : i32
    return %c0_i32, %c0_i32_0 : i32, i32
  }
  func.func @transform_6(%arg0: i32) -> (i32, i32) {
    %c0_i32 = arith.constant 0 : i32
    %c0_i32_0 = arith.constant 0 : i32
    %c0_i32_1 = arith.constant 0 : i32
    return %c0_i32, %c0_i32_0 : i32, i32
  }
  func.func @transform_7(%arg0: i32) -> (i32, i32) {
    %c0_i32 = arith.constant 0 : i32
    %c0_i32_0 = arith.constant 0 : i32
    %c0_i32_1 = arith.constant 0 : i32
    return %c0_i32, %c0_i32_0 : i32, i32
  }
  func.func @transform_8(%arg0: i32) -> (i32, i32) {
    %c0_i32 = arith.constant 0 : i32
    %c0_i32_0 = arith.constant 0 : i32
    %c0_i32_1 = arith.constant 0 : i32
    return %c0_i32, %c0_i32_0 : i32, i32
  }
  func.func @transform_9(%arg0: i32) -> (i32, i32, i32) {
    %c0_i32 = arith.constant 0 : i32
    %c0_i32_0 = arith.constant 0 : i32
    %c0_i32_1 = arith.constant 0 : i32
    return %arg0, %c0_i32, %c0_i32_0 : i32, i32, i32
  }
}

</mosaic_0001>

<llo_original>
// kernel: tpu_custom_call.1
$region0: #{tpu_custom_call.1}
  #allocation0 [shape = 'u32[]', space=smem, size = 0x4, offset = 0x4, fixed_abs, tag = 'smem constant byte address 0x4 - core index']
  #allocation1 [shape = 'u32[144,128]{1,0:T(1,128)}', space=vmem, size = 0x12000, scoped, tag = 'internal scratch']
  %s0 = inlined_call_operand.hbm [shape: f32[2,8,32], index: 0, kind: input, shape index: {}]
  %s1 = inlined_call_operand.hbm [shape: bf16[32,32], index: 1, kind: input, shape index: {}]
  %s2 = inlined_call_operand.hbm [shape: f32[1,32], index: 2, kind: input, shape index: {}]
  %s3 = inlined_call_operand.hbm [shape: bf16[32,32], index: 3, kind: input, shape index: {}]
  %s4 = inlined_call_operand.hbm [shape: f32[1,32], index: 4, kind: input, shape index: {}]
  %s5 = inlined_call_operand.hbm [shape: bf16[32,32], index: 5, kind: input, shape index: {}]
  %s6 = inlined_call_operand.hbm [shape: f32[1,32], index: 6, kind: input, shape index: {}]
  %s7 = inlined_call_operand.hbm [shape: bf16[32,32], index: 7, kind: input, shape index: {}]
  %s8 = inlined_call_operand.hbm [shape: f32[1,32], index: 8, kind: input, shape index: {}]
  %s9 = inlined_call_operand.hbm [shape: f32[2,8,32], index: 9, kind: output, shape index: {}]
  %s10 = sld [smem:[#allocation0]]
  $region105: #{tpu_custom_call.1} parent=0
    _
  %s12 = ssub.s32 1, %s10
  %s13 = scalar_select 0, %s12, %s10
  $region1: #{tpu_custom_call.1} parent=0
    #allocation2 [shape = 'u8[8192]{0}', space=vmem, size = 0x2000, scoped, tag = 'input window, operand 0']
    #allocation3 [shape = 's32[2]{0}', space=sflag, size = 0x8, scoped, tag = 'scoped memory for tpu_custom_call.1']
    #allocation4 [shape = 's32[2]{0}', space=sflag, size = 0x8, scoped, tag = 'scoped memory for tpu_custom_call.1']
    #allocation5 [shape = 'u8[8192]{0}', space=vmem, size = 0x2000, scoped, tag = 'input window, operand 1, single buffered']
    #allocation6 [shape = 's32[1]{0}', space=sflag, size = 0x4, scoped, tag = 'scoped memory for tpu_custom_call.1']
    #allocation7 [shape = 'u8[512]{0}', space=vmem, size = 0x400, scoped, tag = 'input window, operand 2, single buffered']
    #allocation8 [shape = 'u8[8192]{0}', space=vmem, size = 0x2000, scoped, tag = 'input window, operand 3, single buffered']
    #allocation9 [shape = 's32[1]{0}', space=sflag, size = 0x4, scoped, tag = 'scoped memory for tpu_custom_call.1']
    #allocation10 [shape = 'u8[512]{0}', space=vmem, size = 0x400, scoped, tag = 'input window, operand 4, single buffered']
    #allocation11 [shape = 'u8[8192]{0}', space=vmem, size = 0x2000, scoped, tag = 'input window, operand 5, single buffered']
    #allocation12 [shape = 's32[1]{0}', space=sflag, size = 0x4, scoped, tag = 'scoped memory for tpu_custom_call.1']
    #allocation13 [shape = 'u8[512]{0}', space=vmem, size = 0x400, scoped, tag = 'input window, operand 6, single buffered']
    #allocation14 [shape = 'u8[8192]{0}', space=vmem, size = 0x2000, scoped, tag = 'input window, operand 7, single buffered']
    #allocation15 [shape = 's32[1]{0}', space=sflag, size = 0x4, scoped, tag = 'scoped memory for tpu_custom_call.1']
    #allocation16 [shape = 'u8[512]{0}', space=vmem, size = 0x400, scoped, tag = 'input window, operand 8, single buffered']
    #allocation17 [shape = 'u8[8192]{0}', space=vmem, size = 0x2000, scoped, tag = 'output window, operand 0']
    %14 = vsyncpa [#allocation3], 0
    %s15 = scalar_lea.sflag [#allocation3], 1
    %16 = vsyncpa %s15, 0
    %17 = vsyncpa [#allocation6], 0
    %18 = vsyncpa [#allocation9], 0
    %19 = vsyncpa [#allocation12], 0
    %20 = vsyncpa [#allocation15], 0
    %21 = vsyncpa [#allocation4], 0
    %s22 = scalar_lea.sflag [#allocation4], 1
    %23 = vsyncpa %s22, 0
    loop: start=0, step=1, limit=4
    $region2: #{tpu_custom_call.1} parent=1 // loop_pre_header
      _
    $region3: #{tpu_custom_call.1} parent=1 // loop_header
      %s25 = sphi 0, %s29
      %p26 = scmp.ge.s32.totalorder %s25, 4
      %s35 = sphi 0, %s37
      %s38 = sphi 0, %s35
      %s39 = sphi 0, %s38
      %s55 = sphi 0, %s39
      %s59 = sphi 0, %s59
      %s61 = sphi 0, %s59
      %s62 = sphi 0, %s61
      %s76 = sphi 0, %s62
      %s80 = sphi 0, %s80
      %s82 = sphi 0, %s80
      %s83 = sphi 0, %s82
      %s97 = sphi 0, %s83
      %s101 = sphi 0, %s101
      %s103 = sphi 0, %s101
      %s104 = sphi 0, %s103
      %s118 = sphi 0, %s104
      %s122 = sphi 0, %s122
      %s124 = sphi 0, %s122
      %s125 = sphi 0, %s124
      %s139 = sphi 0, %s125
      %s143 = sphi 0, %s143
      %s145 = sphi 0, %s143
      %s146 = sphi 0, %s145
      %s160 = sphi 0, %s146
      %s164 = sphi 0, %s164
      %s166 = sphi 0, %s164
      %s167 = sphi 0, %s166
      %s181 = sphi 0, %s167
      %s185 = sphi 0, %s185
      %s187 = sphi 0, %s185
      %s188 = sphi 0, %s187
      %s202 = sphi 0, %s188
      %s206 = sphi 0, %s206
      %s208 = sphi 0, %s206
      %s209 = sphi 0, %s208
      %s223 = sphi 0, %s209
      %s229 = sphi 0, %s231
      %s232 = sphi 0, %s229
      %s233 = sphi 0, %s232
      %s249 = sphi 0, %s233
    $region4: #{tpu_custom_call.1} parent=1 // loop_header_branch
      %28 = sbr.rel (%p26) target = $region8
    $region5: #{tpu_custom_call.1} parent=1 // loop_body
      %s30 = ssub.s32 %s25, 1
      %s31 = ssub.s32 %s25, 2
      %s32 = sadd.s32 %s25, 1
      %s33 = ssub.s32 %s25, %s32
      %p34 = scmp.eq.s32.totalorder %s33, 0
      %s36 = sadd.s32 %s35, 1
      %s37 = scalar_select %p34, %s35, %s36
      %p40 = pneg %p34
      %p41 = scmp.eq.s32.totalorder %s25, 1
      %p42 = por %p40, %p41
      %p43 = scmp.ne.s32.totalorder %s35, %s38
      %p44 = scmp.eq.s32.totalorder %s25, 0
      %p45 = por %p43, %p44
      %p46 = scmp.ne.s32.totalorder %s35, %s38
      %p47 = scmp.eq.s32.totalorder %s30, 1
      %p48 = por %p46, %p47
      %p49 = scmp.ne.s32.totalorder %s38, %s39
      %p50 = scmp.eq.s32.totalorder %s30, 0
      %p51 = por %p49, %p50
      %p52 = scmp.ne.s32.totalorder %s38, %s39
      %p53 = scmp.eq.s32.totalorder %s31, 1
      %p54 = por %p52, %p53
      %p56 = scmp.ne.s32.totalorder %s39, %s55
      %p57 = scmp.eq.s32.totalorder %s31, 0
      %p58 = por %p56, %p57
      %s60 = sadd.s32 %s59, 1
      %p63 = scmp.eq.s32.totalorder %s25, 1
      %p64 = scmp.ne.s32.totalorder %s59, %s61
      %p65 = scmp.eq.s32.totalorder %s25, 0
      %p66 = por %p64, %p65
      %p67 = scmp.ne.s32.totalorder %s59, %s61
      %p68 = scmp.eq.s32.totalorder %s30, 1
      %p69 = por %p67, %p68
      %p70 = scmp.ne.s32.totalorder %s61, %s62
      %p71 = scmp.eq.s32.totalorder %s30, 0
      %p72 = por %p70, %p71
      %p73 = scmp.ne.s32.totalorder %s61, %s62
      %p74 = scmp.eq.s32.totalorder %s31, 1
      %p75 = por %p73, %p74
      %p77 = scmp.ne.s32.totalorder %s62, %s76
      %p78 = scmp.eq.s32.totalorder %s31, 0
      %p79 = por %p77, %p78
      %s81 = sadd.s32 %s80, 1
      %p84 = scmp.eq.s32.totalorder %s25, 1
      %p85 = scmp.ne.s32.totalorder %s80, %s82
      %p86 = scmp.eq.s32.totalorder %s25, 0
      %p87 = por %p85, %p86
      %p88 = scmp.ne.s32.totalorder %s80, %s82
      %p89 = scmp.eq.s32.totalorder %s30, 1
      %p90 = por %p88, %p89
      %p91 = scmp.ne.s32.totalorder %s82, %s83
      %p92 = scmp.eq.s32.totalorder %s30, 0
      %p93 = por %p91, %p92
      %p94 = scmp.ne.s32.totalorder %s82, %s83
      %p95 = scmp.eq.s32.totalorder %s31, 1
      %p96 = por %p94, %p95
      %p98 = scmp.ne.s32.totalorder %s83, %s97
      %p99 = scmp.eq.s32.totalorder %s31, 0
      %p100 = por %p98, %p99
      %s102 = sadd.s32 %s101, 1
      %p105 = scmp.eq.s32.totalorder %s25, 1
      %p106 = scmp.ne.s32.totalorder %s101, %s103
      %p107 = scmp.eq.s32.totalorder %s25, 0
      %p108 = por %p106, %p107
      %p109 = scmp.ne.s32.totalorder %s101, %s103
      %p110 = scmp.eq.s32.totalorder %s30, 1
      %p111 = por %p109, %p110
      %p112 = scmp.ne.s32.totalorder %s103, %s104
      %p113 = scmp.eq.s32.totalorder %s30, 0
      %p114 = por %p112, %p113
      %p115 = scmp.ne.s32.totalorder %s103, %s104
      %p116 = scmp.eq.s32.totalorder %s31, 1
      %p117 = por %p115, %p116
      %p119 = scmp.ne.s32.totalorder %s104, %s118
      %p120 = scmp.eq.s32.totalorder %s31, 0
      %p121 = por %p119, %p120
      %s123 = sadd.s32 %s122, 1
      %p126 = scmp.eq.s32.totalorder %s25, 1
      %p127 = scmp.ne.s32.totalorder %s122, %s124
      %p128 = scmp.eq.s32.totalorder %s25, 0
      %p129 = por %p127, %p128
      %p130 = scmp.ne.s32.totalorder %s122, %s124
      %p131 = scmp.eq.s32.totalorder %s30, 1
      %p132 = por %p130, %p131
      %p133 = scmp.ne.s32.totalorder %s124, %s125
      %p134 = scmp.eq.s32.totalorder %s30, 0
      %p135 = por %p133, %p134
      %p136 = scmp.ne.s32.totalorder %s124, %s125
      %p137 = scmp.eq.s32.totalorder %s31, 1
      %p138 = por %p136, %p137
      %p140 = scmp.ne.s32.totalorder %s125, %s139
      %p141 = scmp.eq.s32.totalorder %s31, 0
      %p142 = por %p140, %p141
      %s144 = sadd.s32 %s143, 1
      %p147 = scmp.eq.s32.totalorder %s25, 1
      %p148 = scmp.ne.s32.totalorder %s143, %s145
      %p149 = scmp.eq.s32.totalorder %s25, 0
      %p150 = por %p148, %p149
      %p151 = scmp.ne.s32.totalorder %s143, %s145
      %p152 = scmp.eq.s32.totalorder %s30, 1
      %p153 = por %p151, %p152
      %p154 = scmp.ne.s32.totalorder %s145, %s146
      %p155 = scmp.eq.s32.totalorder %s30, 0
      %p156 = por %p154, %p155
      %p157 = scmp.ne.s32.totalorder %s145, %s146
      %p158 = scmp.eq.s32.totalorder %s31, 1
      %p159 = por %p157, %p158
      %p161 = scmp.ne.s32.totalorder %s146, %s160
      %p162 = scmp.eq.s32.totalorder %s31, 0
      %p163 = por %p161, %p162
      %s165 = sadd.s32 %s164, 1
      %p168 = scmp.eq.s32.totalorder %s25, 1
      %p169 = scmp.ne.s32.totalorder %s164, %s166
      %p170 = scmp.eq.s32.totalorder %s25, 0
      %p171 = por %p169, %p170
      %p172 = scmp.ne.s32.totalorder %s164, %s166
      %p173 = scmp.eq.s32.totalorder %s30, 1
      %p174 = por %p172, %p173
      %p175 = scmp.ne.s32.totalorder %s166, %s167
      %p176 = scmp.eq.s32.totalorder %s30, 0
      %p177 = por %p175, %p176
      %p178 = scmp.ne.s32.totalorder %s166, %s167
      %p179 = scmp.eq.s32.totalorder %s31, 1
      %p180 = por %p178, %p179
      %p182 = scmp.ne.s32.totalorder %s167, %s181
      %p183 = scmp.eq.s32.totalorder %s31, 0
      %p184 = por %p182, %p183
      %s186 = sadd.s32 %s185, 1
      %p189 = scmp.eq.s32.totalorder %s25, 1
      %p190 = scmp.ne.s32.totalorder %s185, %s187
      %p191 = scmp.eq.s32.totalorder %s25, 0
      %p192 = por %p190, %p191
      %p193 = scmp.ne.s32.totalorder %s185, %s187
      %p194 = scmp.eq.s32.totalorder %s30, 1
      %p195 = por %p193, %p194
      %p196 = scmp.ne.s32.totalorder %s187, %s188
      %p197 = scmp.eq.s32.totalorder %s30, 0
      %p198 = por %p196, %p197
      %p199 = scmp.ne.s32.totalorder %s187, %s188
      %p200 = scmp.eq.s32.totalorder %s31, 1
      %p201 = por %p199, %p200
      %p203 = scmp.ne.s32.totalorder %s188, %s202
      %p204 = scmp.eq.s32.totalorder %s31, 0
      %p205 = por %p203, %p204
      %s207 = sadd.s32 %s206, 1
      %p210 = scmp.eq.s32.totalorder %s25, 1
      %p211 = scmp.ne.s32.totalorder %s206, %s208
      %p212 = scmp.eq.s32.totalorder %s25, 0
      %p213 = por %p211, %p212
      %p214 = scmp.ne.s32.totalorder %s206, %s208
      %p215 = scmp.eq.s32.totalorder %s30, 1
      %p216 = por %p214, %p215
      %p217 = scmp.ne.s32.totalorder %s208, %s209
      %p218 = scmp.eq.s32.totalorder %s30, 0
      %p219 = por %p217, %p218
      %p220 = scmp.ne.s32.totalorder %s208, %s209
      %p221 = scmp.eq.s32.totalorder %s31, 1
      %p222 = por %p220, %p221
      %p224 = scmp.ne.s32.totalorder %s209, %s223
      %p225 = scmp.eq.s32.totalorder %s31, 0
      %p226 = por %p224, %p225
      %s227 = ssub.s32 %s25, %s32
      %p228 = scmp.eq.s32.totalorder %s227, 0
      %s230 = sadd.s32 %s229, 1
      %s231 = scalar_select %p228, %s229, %s230
      %p234 = pneg %p228
      %p235 = scmp.eq.s32.totalorder %s25, 1
      %p236 = por %p234, %p235
      %p237 = scmp.ne.s32.totalorder %s229, %s232
      %p238 = scmp.eq.s32.totalorder %s25, 0
      %p239 = por %p237, %p238
      %p240 = scmp.ne.s32.totalorder %s229, %s232
      %p241 = scmp.eq.s32.totalorder %s30, 1
      %p242 = por %p240, %p241
      %p243 = scmp.ne.s32.totalorder %s232, %s233
      %p244 = scmp.eq.s32.totalorder %s30, 0
      %p245 = por %p243, %p244
      %p246 = scmp.ne.s32.totalorder %s232, %s233
      %p247 = scmp.eq.s32.totalorder %s31, 1
      %p248 = por %p246, %p247
      %p250 = scmp.ne.s32.totalorder %s233, %s249
      %p251 = scmp.eq.s32.totalorder %s31, 0
      %p252 = por %p250, %p251
      %p253 = scmp.le.s32.totalorder 1, %s25
      %p254 = scmp.lt.s32.totalorder %s25, 3
      %p255 = pnand %p253, %p254
      %p256 = pneg %p255
      // Predicated region
      $region9: #{tpu_custom_call.1} parent=5 // pred_check
        _
      $region10: #{tpu_custom_call.1} parent=5 // pred_check_branch
        %258 = sbr.rel (%p255) target = $region12
      $region11: #{tpu_custom_call.1} parent=5 // pred_region
        %s259 = ssub.s32 %s25, 1
        // Predicated region
        $region13: #{tpu_custom_call.1} parent=11 // pred_check
          %p260 = pneg %p72
        $region14: #{tpu_custom_call.1} parent=11 // pred_check_branch
          %262 = sbr.rel (%p260) target = $region16
        $region15: #{tpu_custom_call.1} parent=11 // pred_region
          %s264 = ssub.s32 256, 256
          %265 = vsyncadd [#allocation6], %s264
          %s266 = sshll.u32 [#allocation5], 4
          %s267 = int_to_ptr.vmem [resolvable:$true] %s266
          %272 = dma.hbm_to_vmem [thread:$0]  %s1, 256, %s267, [#allocation6], 64, 64, 4
        $region16: #{tpu_custom_call.1} parent=11 // pred_fallthru
          _
        // Predicated region
        $region17: #{tpu_custom_call.1} parent=11 // pred_check
          %p273 = pneg %p93
        $region18: #{tpu_custom_call.1} parent=11 // pred_check_branch
          %275 = sbr.rel (%p273) target = $region20
        $region19: #{tpu_custom_call.1} parent=11 // pred_region
          %s277 = ssub.s32 16, 16
          %278 = vsyncadd [#allocation6], %s277
          %s280 = sshll.u32 [#allocation7], 4
          %s281 = int_to_ptr.vmem [resolvable:$true] %s280
          %283 = dma.hbm_to_vmem [thread:$0]  %s2, 16, %s281, [#allocation6]
        $region20: #{tpu_custom_call.1} parent=11 // pred_fallthru
          _
        // Predicated region
        $region21: #{tpu_custom_call.1} parent=11 // pred_check
          %p284 = pneg %p114
        $region22: #{tpu_custom_call.1} parent=11 // pred_check_branch
          %286 = sbr.rel (%p284) target = $region24
        $region23: #{tpu_custom_call.1} parent=11 // pred_region
          %s288 = ssub.s32 256, 256
          %289 = vsyncadd [#allocation9], %s288
          %s290 = sshll.u32 [#allocation8], 4
          %s291 = int_to_ptr.vmem [resolvable:$true] %s290
          %296 = dma.hbm_to_vmem [thread:$0]  %s3, 256, %s291, [#allocation9], 64, 64, 4
        $region24: #{tpu_custom_call.1} parent=11 // pred_fallthru
          _
        // Predicated region
        $region25: #{tpu_custom_call.1} parent=11 // pred_check
          %p297 = pneg %p135
        $region26: #{tpu_custom_call.1} parent=11 // pred_check_branch
          %299 = sbr.rel (%p297) target = $region28
        $region27: #{tpu_custom_call.1} parent=11 // pred_region
          %s301 = ssub.s32 16, 16
          %302 = vsyncadd [#allocation9], %s301
          %s304 = sshll.u32 [#allocation10], 4
          %s305 = int_to_ptr.vmem [resolvable:$true] %s304
          %307 = dma.hbm_to_vmem [thread:$0]  %s4, 16, %s305, [#allocation9]
        $region28: #{tpu_custom_call.1} parent=11 // pred_fallthru
          _
        // Predicated region
        $region29: #{tpu_custom_call.1} parent=11 // pred_check
          %p308 = pneg %p156
        $region30: #{tpu_custom_call.1} parent=11 // pred_check_branch
          %310 = sbr.rel (%p308) target = $region32
        $region31: #{tpu_custom_call.1} parent=11 // pred_region
          %s312 = ssub.s32 256, 256
          %313 = vsyncadd [#allocation12], %s312
          %s314 = sshll.u32 [#allocation11], 4
          %s315 = int_to_ptr.vmem [resolvable:$true] %s314
          %320 = dma.hbm_to_vmem [thread:$0]  %s5, 256, %s315, [#allocation12], 64, 64, 4
        $region32: #{tpu_custom_call.1} parent=11 // pred_fallthru
          _
        // Predicated region
        $region33: #{tpu_custom_call.1} parent=11 // pred_check
          %p321 = pneg %p177
        $region34: #{tpu_custom_call.1} parent=11 // pred_check_branch
          %323 = sbr.rel (%p321) target = $region36
        $region35: #{tpu_custom_call.1} parent=11 // pred_region
          %s325 = ssub.s32 16, 16
          %326 = vsyncadd [#allocation12], %s325
          %s328 = sshll.u32 [#allocation13], 4
          %s329 = int_to_ptr.vmem [resolvable:$true] %s328
          %331 = dma.hbm_to_vmem [thread:$0]  %s6, 16, %s329, [#allocation12]
        $region36: #{tpu_custom_call.1} parent=11 // pred_fallthru
          _
        // Predicated region
        $region37: #{tpu_custom_call.1} parent=11 // pred_check
          %p332 = pneg %p198
        $region38: #{tpu_custom_call.1} parent=11 // pred_check_branch
          %334 = sbr.rel (%p332) target = $region40
        $region39: #{tpu_custom_call.1} parent=11 // pred_region
          %s336 = ssub.s32 256, 256
          %337 = vsyncadd [#allocation15], %s336
          %s338 = sshll.u32 [#allocation14], 4
          %s339 = int_to_ptr.vmem [resolvable:$true] %s338
          %344 = dma.hbm_to_vmem [thread:$0]  %s7, 256, %s339, [#allocation15], 64, 64, 4
        $region40: #{tpu_custom_call.1} parent=11 // pred_fallthru
          _
        // Predicated region
        $region41: #{tpu_custom_call.1} parent=11 // pred_check
          %p345 = pneg %p219
        $region42: #{tpu_custom_call.1} parent=11 // pred_check_branch
          %347 = sbr.rel (%p345) target = $region44
        $region43: #{tpu_custom_call.1} parent=11 // pred_region
          %s349 = ssub.s32 16, 16
          %350 = vsyncadd [#allocation15], %s349
          %s352 = sshll.u32 [#allocation16], 4
          %s353 = int_to_ptr.vmem [resolvable:$true] %s352
          %355 = dma.hbm_to_vmem [thread:$0]  %s8, 16, %s353, [#allocation15]
        $region44: #{tpu_custom_call.1} parent=11 // pred_fallthru
          _
      $region12: #{tpu_custom_call.1} parent=5 // pred_fallthru
        _
      %p356 = scmp.lt.s32.totalorder %s25, 2
      // Predicated region
      $region45: #{tpu_custom_call.1} parent=5 // pred_check
        %p357 = pneg %p356
      $region46: #{tpu_custom_call.1} parent=5 // pred_check_branch
        %359 = sbr.rel (%p357) target = $region48
      $region47: #{tpu_custom_call.1} parent=5 // pred_region
        // Predicated region
        $region49: #{tpu_custom_call.1} parent=47 // pred_check
          %p360 = pneg %p45
        $region50: #{tpu_custom_call.1} parent=47 // pred_check_branch
          %362 = sbr.rel (%p360) target = $region52
        $region51: #{tpu_custom_call.1} parent=47 // pred_region
          %s363 = sand.u32 %s35, 1
          %s364 = scalar_lea.sflag [#allocation3], %s363
          %s365 = sand.u32 %s35, 1
          %s366 = smul.addr %s365, 8
          %s367 = scalar_lea.vmem [#allocation2], %s366
          %s369 = ssub.s32 128, 128
          %370 = vsyncadd %s364, %s369
          %s371 = smul.addr %s25, 128
          %s372 = scalar_lea.hbm %s0, %s371
          %s374 = sshll.u32 %s367, 4
          %s375 = int_to_ptr.vmem [resolvable:$true] %s374
          %377 = dma.hbm_to_vmem [thread:$0]  %s372, 128, %s375, %s364
        $region52: #{tpu_custom_call.1} parent=47 // pred_fallthru
          _
      $region48: #{tpu_custom_call.1} parent=5 // pred_fallthru
        _
      %p378 = scmp.le.s32.totalorder 1, %s25
      %p379 = scmp.lt.s32.totalorder %s25, 3
      %p380 = pnand %p378, %p379
      %p381 = pneg %p380
      // Predicated region
      $region53: #{tpu_custom_call.1} parent=5 // pred_check
        _
      $region54: #{tpu_custom_call.1} parent=5 // pred_check_branch
        %383 = sbr.rel (%p380) target = $region56
      $region55: #{tpu_custom_call.1} parent=5 // pred_region
        %s384 = ssub.s32 %s25, 1
        %s385 = sand.u32 %s38, 1
        %s386 = scalar_lea.sflag [#allocation3], %s385
        %s387 = sand.u32 %s38, 1
        %s388 = smul.addr %s387, 8
        %s389 = scalar_lea.vmem [#allocation2], %s388
        // Predicated region
        $region57: #{tpu_custom_call.1} parent=55 // pred_check
          %p390 = pneg %p51
        $region58: #{tpu_custom_call.1} parent=55 // pred_check_branch
          %392 = sbr.rel (%p390) target = $region60
        $region59: #{tpu_custom_call.1} parent=55 // pred_region
          %393 = dma.done %s386, 128
        $region60: #{tpu_custom_call.1} parent=55 // pred_fallthru
          _
        // Predicated region
        $region61: #{tpu_custom_call.1} parent=55 // pred_check
          %p394 = pneg %p72
        $region62: #{tpu_custom_call.1} parent=55 // pred_check_branch
          %396 = sbr.rel (%p394) target = $region64
        $region63: #{tpu_custom_call.1} parent=55 // pred_region
          %397 = dma.done [#allocation6], 256
        $region64: #{tpu_custom_call.1} parent=55 // pred_fallthru
          _
        // Predicated region
        $region65: #{tpu_custom_call.1} parent=55 // pred_check
          %p398 = pneg %p93
        $region66: #{tpu_custom_call.1} parent=55 // pred_check_branch
          %400 = sbr.rel (%p398) target = $region68
        $region67: #{tpu_custom_call.1} parent=55 // pred_region
          %401 = dma.done [#allocation6], 16
        $region68: #{tpu_custom_call.1} parent=55 // pred_fallthru
          _
        // Predicated region
        $region69: #{tpu_custom_call.1} parent=55 // pred_check
          %p402 = pneg %p114
        $region70: #{tpu_custom_call.1} parent=55 // pred_check_branch
          %404 = sbr.rel (%p402) target = $region72
        $region71: #{tpu_custom_call.1} parent=55 // pred_region
          %405 = dma.done [#allocation9], 256
        $region72: #{tpu_custom_call.1} parent=55 // pred_fallthru
          _
        // Predicated region
        $region73: #{tpu_custom_call.1} parent=55 // pred_check
          %p406 = pneg %p135
        $region74: #{tpu_custom_call.1} parent=55 // pred_check_branch
          %408 = sbr.rel (%p406) target = $region76
        $region75: #{tpu_custom_call.1} parent=55 // pred_region
          %409 = dma.done [#allocation9], 16
        $region76: #{tpu_custom_call.1} parent=55 // pred_fallthru
          _
        // Predicated region
        $region77: #{tpu_custom_call.1} parent=55 // pred_check
          %p410 = pneg %p156
        $region78: #{tpu_custom_call.1} parent=55 // pred_check_branch
          %412 = sbr.rel (%p410) target = $region80
        $region79: #{tpu_custom_call.1} parent=55 // pred_region
          %413 = dma.done [#allocation12], 256
        $region80: #{tpu_custom_call.1} parent=55 // pred_fallthru
          _
        // Predicated region
        $region81: #{tpu_custom_call.1} parent=55 // pred_check
          %p414 = pneg %p177
        $region82: #{tpu_custom_call.1} parent=55 // pred_check_branch
          %416 = sbr.rel (%p414) target = $region84
        $region83: #{tpu_custom_call.1} parent=55 // pred_region
          %417 = dma.done [#allocation12], 16
        $region84: #{tpu_custom_call.1} parent=55 // pred_fallthru
          _
        // Predicated region
        $region85: #{tpu_custom_call.1} parent=55 // pred_check
          %p418 = pneg %p198
        $region86: #{tpu_custom_call.1} parent=55 // pred_check_branch
          %420 = sbr.rel (%p418) target = $region88
        $region87: #{tpu_custom_call.1} parent=55 // pred_region
          %421 = dma.done [#allocation15], 256
        $region88: #{tpu_custom_call.1} parent=55 // pred_fallthru
          _
        // Predicated region
        $region89: #{tpu_custom_call.1} parent=55 // pred_check
          %p422 = pneg %p219
        $region90: #{tpu_custom_call.1} parent=55 // pred_check_branch
          %424 = sbr.rel (%p422) target = $region92
        $region91: #{tpu_custom_call.1} parent=55 // pred_region
          %425 = dma.done [#allocation15], 16
        $region92: #{tpu_custom_call.1} parent=55 // pred_fallthru
          _
        %s426 = sand.u32 %s38, 1
        %s427 = scalar_lea.sflag [#allocation3], %s426
        %s428 = sand.u32 %s38, 1
        %s429 = smul.addr %s428, 8
        %s430 = scalar_lea.vmem [#allocation2], %s429
        %p431 = pneg %p51
        %p432 = pneg %p48
        %p433 = pneg %p72
        %p434 = pneg %p69
        %p435 = pneg %p93
        %p436 = pneg %p90
        %p437 = pneg %p114
        %p438 = pneg %p111
        %p439 = pneg %p135
        %p440 = pneg %p132
        %p441 = pneg %p156
        %p442 = pneg %p153
        %p443 = pneg %p177
        %p444 = pneg %p174
        %p445 = pneg %p198
        %p446 = pneg %p195
        %p447 = pneg %p219
        %p448 = pneg %p216
        %p449 = pneg %p245
        %p450 = pneg %p242
        %s451 = sand.u32 %s232, 1
        %s452 = scalar_lea.sflag [#allocation4], %s451
        %s453 = sand.u32 %s232, 1
        %s454 = smul.addr %s453, 8
        %s455 = scalar_lea.vmem [#allocation17], %s454
        %v457 = vld [vmem:[%s389] sm:$0xff]
        %v458 = vpack.c.bf16 %v457, %v457
        %v459 = vld [vmem:[#allocation5] sm:$0xf]
        %v460 = vld [vmem:[#allocation5 + $0x4] sm:$0xf]
        %v461 = vld [vmem:[#allocation5 + $0x8] sm:$0xf]
        %v462 = vld [vmem:[#allocation5 + $0xc] sm:$0xf]
        %v463 = vld [vmem:[#allocation7] sm:$0x1]
        %v465 = vlaneseq
        %v466 = vshrl.u32 %v465, 7
        %v467 = vsub.s32 0, %v466
        %v468 = vrot.slane %v463, %v467
        %v474 = vunpack.c.l.b16 %v459
        %v475 = vunpack.c.l.b16 %v460
        %v476 = vunpack.c.l.b16 %v461
        %v477 = vunpack.c.l.b16 %v462
        %v478 = vpack.c.b16 %v475, %v474
        %v479 = vpack.c.b16 %v477, %v476
        %vm482 = vcmask 261120
        %v484 = vsel %vm482, %v458, 0
        %486 = vmatprep.subr.bf16.mxu0 0
        %487 = vmatpush1.bf16.msra.mxu0 %v478
        %488 = vmatprep.subr.bf16.mxu0 0
        %489 = vmatpush1.bf16.msra.mxu0 %v479
        %490 = vmatprep.subr.bf16.mxu0 0
        %491 = vmatpush1.bf16.msra.mxu0 0
        %492 = vmatprep.subr.bf16.mxu0 0
        %493 = vmatpush1.bf16.msra.mxu0 0
        %494 = vmatprep.subr.bf16.mxu0 0
        %495 = vmatpush1.bf16.msra.mxu0 0
        %496 = vmatprep.subr.bf16.mxu0 0
        %497 = vmatpush1.bf16.msra.mxu0 0
        %498 = vmatprep.subr.bf16.mxu0 0
        %499 = vmatpush1.bf16.msra.mxu0 0
        %500 = vmatprep.subr.bf16.mxu0 0
        %501 = vmatpush1.bf16.msra.mxu0 0
        %502 = vmatprep.subr.bf16.mxu0 0
        %503 = vmatpush1.bf16.msra.mxu0 0
        %504 = vmatprep.subr.bf16.mxu0 0
        %505 = vmatpush1.bf16.msra.mxu0 0
        %506 = vmatprep.subr.bf16.mxu0 0
        %507 = vmatpush1.bf16.msra.mxu0 0
        %508 = vmatprep.subr.bf16.mxu0 0
        %509 = vmatpush1.bf16.msra.mxu0 0
        %510 = vmatprep.subr.bf16.mxu0 0
        %511 = vmatpush1.bf16.msra.mxu0 0
        %512 = vmatprep.subr.bf16.mxu0 0
        %513 = vmatpush1.bf16.msra.mxu0 0
        %514 = vmatprep.subr.bf16.mxu0 0
        %515 = vmatpush1.bf16.msra.mxu0 0
        %516 = vmatprep.subr.bf16.mxu0 0
        %517 = vmatpush1.bf16.msra.mxu0 0
        %518 = vmatprep.mubr.bf16.mxu0 0
        %519 = vmatmul.mubr.bf16.gmra.mrb[0].mxu0 %v484
        %v520 = vpop.f32.mrb[0].mxu0
        %v521 = vadd.f32 %v468, %v520
        %v522 = vpop.f32.mrb[0].mxu0
        %v523 = vpop.f32.mrb[0].mxu0
        %v524 = vpop.f32.mrb[0].mxu0
        %525 = vdwg.mxu0
        %v526 = vpack.c.bf16 %v521, %v521
        %v527 = vld [vmem:[#allocation8] sm:$0xf]
        %v528 = vld [vmem:[#allocation8 + $0x4] sm:$0xf]
        %v529 = vld [vmem:[#allocation8 + $0x8] sm:$0xf]
        %v530 = vld [vmem:[#allocation8 + $0xc] sm:$0xf]
        %v531 = vld [vmem:[#allocation10] sm:$0x1]
        %v533 = vlaneseq
        %v534 = vshrl.u32 %v533, 7
        %v535 = vsub.s32 0, %v534
        %v536 = vrot.slane %v531, %v535
        %v542 = vunpack.c.l.b16 %v527
        %v543 = vunpack.c.l.b16 %v528
        %v544 = vunpack.c.l.b16 %v529
        %v545 = vunpack.c.l.b16 %v530
        %v546 = vpack.c.b16 %v543, %v542
        %v547 = vpack.c.b16 %v545, %v544
        %550 = vmatprep.subr.bf16.mxu0 0
        %551 = vmatpush1.bf16.msra.mxu0 %v546
        %552 = vmatprep.subr.bf16.mxu0 0
        %553 = vmatpush1.bf16.msra.mxu0 %v547
        %554 = vmatprep.subr.bf16.mxu0 0
        %555 = vmatpush1.bf16.msra.mxu0 0
        %556 = vmatprep.subr.bf16.mxu0 0
        %557 = vmatpush1.bf16.msra.mxu0 0
        %558 = vmatprep.subr.bf16.mxu0 0
        %559 = vmatpush1.bf16.msra.mxu0 0
        %560 = vmatprep.subr.bf16.mxu0 0
        %561 = vmatpush1.bf16.msra.mxu0 0
        %562 = vmatprep.subr.bf16.mxu0 0
        %563 = vmatpush1.bf16.msra.mxu0 0
        %564 = vmatprep.subr.bf16.mxu0 0
        %565 = vmatpush1.bf16.msra.mxu0 0
        %566 = vmatprep.subr.bf16.mxu0 0
        %567 = vmatpush1.bf16.msra.mxu0 0
        %568 = vmatprep.subr.bf16.mxu0 0
        %569 = vmatpush1.bf16.msra.mxu0 0
        %570 = vmatprep.subr.bf16.mxu0 0
        %571 = vmatpush1.bf16.msra.mxu0 0
        %572 = vmatprep.subr.bf16.mxu0 0
        %573 = vmatpush1.bf16.msra.mxu0 0
        %574 = vmatprep.subr.bf16.mxu0 0
        %575 = vmatpush1.bf16.msra.mxu0 0
        %576 = vmatprep.subr.bf16.mxu0 0
        %577 = vmatpush1.bf16.msra.mxu0 0
        %578 = vmatprep.subr.bf16.mxu0 0
        %579 = vmatpush1.bf16.msra.mxu0 0
        %580 = vmatprep.subr.bf16.mxu0 0
        %581 = vmatpush1.bf16.msra.mxu0 0
        %582 = vmatprep.mubr.bf16.mxu0 0
        %583 = vmatmul.mubr.bf16.gmra.mrb[0].mxu0 %v484
        %v584 = vpop.f32.mrb[0].mxu0
        %v585 = vadd.f32 %v536, %v584
        %v586 = vpop.f32.mrb[0].mxu0
        %v587 = vpop.f32.mrb[0].mxu0
        %v588 = vpop.f32.mrb[0].mxu0
        %589 = vdwg.mxu0
        %v590 = vpack.c.bf16 %v585, %v585
        %v591 = vld [vmem:[#allocation11] sm:$0xf]
        %v592 = vld [vmem:[#allocation11 + $0x4] sm:$0xf]
        %v593 = vld [vmem:[#allocation11 + $0x8] sm:$0xf]
        %v594 = vld [vmem:[#allocation11 + $0xc] sm:$0xf]
        %v595 = vld [vmem:[#allocation13] sm:$0x1]
        %v597 = vlaneseq
        %v598 = vshrl.u32 %v597, 7
        %v599 = vsub.s32 0, %v598
        %v600 = vrot.slane %v595, %v599
        %v606 = vunpack.c.l.b16 %v591
        %v607 = vunpack.c.l.b16 %v592
        %v608 = vunpack.c.l.b16 %v593
        %v609 = vunpack.c.l.b16 %v594
        %v610 = vpack.c.b16 %v607, %v606
        %v611 = vpack.c.b16 %v609, %v608
        %614 = vmatprep.subr.bf16.mxu0 0
        %615 = vmatpush1.bf16.msra.mxu0 %v610
        %616 = vmatprep.subr.bf16.mxu0 0
        %617 = vmatpush1.bf16.msra.mxu0 %v611
        %618 = vmatprep.subr.bf16.mxu0 0
        %619 = vmatpush1.bf16.msra.mxu0 0
        %620 = vmatprep.subr.bf16.mxu0 0
        %621 = vmatpush1.bf16.msra.mxu0 0
        %622 = vmatprep.subr.bf16.mxu0 0
        %623 = vmatpush1.bf16.msra.mxu0 0
        %624 = vmatprep.subr.bf16.mxu0 0
        %625 = vmatpush1.bf16.msra.mxu0 0
        %626 = vmatprep.subr.bf16.mxu0 0
        %627 = vmatpush1.bf16.msra.mxu0 0
        %628 = vmatprep.subr.bf16.mxu0 0
        %629 = vmatpush1.bf16.msra.mxu0 0
        %630 = vmatprep.subr.bf16.mxu0 0
        %631 = vmatpush1.bf16.msra.mxu0 0
        %632 = vmatprep.subr.bf16.mxu0 0
        %633 = vmatpush1.bf16.msra.mxu0 0
        %634 = vmatprep.subr.bf16.mxu0 0
        %635 = vmatpush1.bf16.msra.mxu0 0
        %636 = vmatprep.subr.bf16.mxu0 0
        %637 = vmatpush1.bf16.msra.mxu0 0
        %638 = vmatprep.subr.bf16.mxu0 0
        %639 = vmatpush1.bf16.msra.mxu0 0
        %640 = vmatprep.subr.bf16.mxu0 0
        %641 = vmatpush1.bf16.msra.mxu0 0
        %642 = vmatprep.subr.bf16.mxu0 0
        %643 = vmatpush1.bf16.msra.mxu0 0
        %644 = vmatprep.subr.bf16.mxu0 0
        %645 = vmatpush1.bf16.msra.mxu0 0
        %646 = vmatprep.mubr.bf16.mxu0 0
        %647 = vmatmul.mubr.bf16.gmra.mrb[0].mxu0 %v484
        %v648 = vpop.f32.mrb[0].mxu0
        %v649 = vadd.f32 %v600, %v648
        %v650 = vpop.f32.mrb[0].mxu0
        %v651 = vpop.f32.mrb[0].mxu0
        %v652 = vpop.f32.mrb[0].mxu0
        %653 = vdwg.mxu0
        %v654 = vpack.c.bf16 %v649, %v649
        %vm655 = vcmask 64512
        %v657 = vsel %vm655, %v526, 0
        %v660 = vsel %vm655, %v590, 0
        %662 = vmatprep.subr.bf16.mxu0 0
        %663 = vmatpush1.bf16.xpose.msra.mxu0 %v660
        %664 = vmatprep.subr.bf16.mxu0 0
        %665 = vmatpush1.bf16.xpose.msra.mxu0 0
        %666 = vmatprep.subr.bf16.mxu0 0
        %667 = vmatpush1.bf16.xpose.msra.mxu0 0
        %668 = vmatprep.subr.bf16.mxu0 0
        %669 = vmatpush1.bf16.xpose.msra.mxu0 0
        %670 = vmatprep.subr.bf16.mxu0 0
        %671 = vmatpush1.bf16.xpose.msra.mxu0 0
        %672 = vmatprep.subr.bf16.mxu0 0
        %673 = vmatpush1.bf16.xpose.msra.mxu0 0
        %674 = vmatprep.subr.bf16.mxu0 0
        %675 = vmatpush1.bf16.xpose.msra.mxu0 0
        %676 = vmatprep.subr.bf16.mxu0 0
        %677 = vmatpush1.bf16.xpose.msra.mxu0 0
        %678 = vmatprep.subr.bf16.mxu0 0
        %679 = vmatpush1.bf16.xpose.msra.mxu0 0
        %680 = vmatprep.subr.bf16.mxu0 0
        %681 = vmatpush1.bf16.xpose.msra.mxu0 0
        %682 = vmatprep.subr.bf16.mxu0 0
        %683 = vmatpush1.bf16.xpose.msra.mxu0 0
        %684 = vmatprep.subr.bf16.mxu0 0
        %685 = vmatpush1.bf16.xpose.msra.mxu0 0
        %686 = vmatprep.subr.bf16.mxu0 0
        %687 = vmatpush1.bf16.xpose.msra.mxu0 0
        %688 = vmatprep.subr.bf16.mxu0 0
        %689 = vmatpush1.bf16.xpose.msra.mxu0 0
        %690 = vmatprep.subr.bf16.mxu0 0
        %691 = vmatpush1.bf16.xpose.msra.mxu0 0
        %692 = vmatprep.subr.bf16.mxu0 0
        %693 = vmatpush1.bf16.xpose.msra.mxu0 0
        %694 = vmatprep.mubr.bf16.mxu0 0
        %695 = vmatmul.mubr.bf16.gmra.mrb[0].mxu0 %v657
        %v696 = vpop.f32.mrb[0].mxu0
        %v697 = vadd.f32 0.0, %v696
        %v698 = vpop.f32.mrb[0].mxu0
        %v699 = vpop.f32.mrb[0].mxu0
        %v700 = vpop.f32.mrb[0].mxu0
        %701 = vdwg.mxu0
        %v702 = vsel %vm655, %v697, -inf
        %703 = vmax.xlane.f32.xlu0 %v702
        %v704 = vpop.xlane.xlu0 %703
        %v705 = vsub.f32 %v697, %v704
        %v706 = vmul.f32 %v705, 1.442695
        %v707 = vpow.pop %v706
        %v708 = vsel %vm655, %v707, 0.0
        %709 = vadd.xlane.f32.xlu0 %v708
        %v710 = vpop.xlane.xlu0 %709
        %v711 = vrcp.pop %v710
        %v712 = vmul.f32 %v707, %v711
        %v713 = vpack.c.bf16 %v712, %v712
        %v715 = vsel %vm655, %v713, 0
        %vm717 = vcmask 1043456
        %v719 = vsel %vm717, %v654, 0
        %721 = vmatprep.subr.bf16.mxu0 0
        %722 = vmatpush1.bf16.msra.mxu0 %v719
        %723 = vmatprep.subr.bf16.mxu0 0
        %724 = vmatpush1.bf16.msra.mxu0 0
        %725 = vmatprep.subr.bf16.mxu0 0
        %726 = vmatpush1.bf16.msra.mxu0 0
        %727 = vmatprep.subr.bf16.mxu0 0
        %728 = vmatpush1.bf16.msra.mxu0 0
        %729 = vmatprep.subr.bf16.mxu0 0
        %730 = vmatpush1.bf16.msra.mxu0 0
        %731 = vmatprep.subr.bf16.mxu0 0
        %732 = vmatpush1.bf16.msra.mxu0 0
        %733 = vmatprep.subr.bf16.mxu0 0
        %734 = vmatpush1.bf16.msra.mxu0 0
        %735 = vmatprep.subr.bf16.mxu0 0
        %736 = vmatpush1.bf16.msra.mxu0 0
        %737 = vmatprep.subr.bf16.mxu0 0
        %738 = vmatpush1.bf16.msra.mxu0 0
        %739 = vmatprep.subr.bf16.mxu0 0
        %740 = vmatpush1.bf16.msra.mxu0 0
        %741 = vmatprep.subr.bf16.mxu0 0
        %742 = vmatpush1.bf16.msra.mxu0 0
        %743 = vmatprep.subr.bf16.mxu0 0
        %744 = vmatpush1.bf16.msra.mxu0 0
        %745 = vmatprep.subr.bf16.mxu0 0
        %746 = vmatpush1.bf16.msra.mxu0 0
        %747 = vmatprep.subr.bf16.mxu0 0
        %748 = vmatpush1.bf16.msra.mxu0 0
        %749 = vmatprep.subr.bf16.mxu0 0
        %750 = vmatpush1.bf16.msra.mxu0 0
        %751 = vmatprep.subr.bf16.mxu0 0
        %752 = vmatpush1.bf16.msra.mxu0 0
        %753 = vmatprep.mubr.bf16.mxu0 0
        %754 = vmatmul.mubr.bf16.gmra.mrb[0].mxu0 %v715
        %v755 = vpop.f32.mrb[0].mxu0
        %v756 = vadd.f32 0.0, %v755
        %v757 = vpop.f32.mrb[0].mxu0
        %v758 = vpop.f32.mrb[0].mxu0
        %v759 = vpop.f32.mrb[0].mxu0
        %760 = vdwg.mxu0
        %v761 = vpack.c.bf16 %v756, %v756
        %v762 = vld [vmem:[#allocation14] sm:$0xf]
        %764 = vrot.lane.b32.xlu0 %v526, 120
        %v765 = vpop.permute.xlu0 %764
        %767 = vrot.lane.b32.xlu0 %v590, 120
        %v768 = vpop.permute.xlu0 %767
        %v770 = vsel %vm655, %v765, 0
        %v773 = vsel %vm655, %v768, 0
        %775 = vmatprep.subr.bf16.mxu0 0
        %776 = vmatpush1.bf16.xpose.msra.mxu0 %v773
        %777 = vmatprep.subr.bf16.mxu0 0
        %778 = vmatpush1.bf16.xpose.msra.mxu0 0
        %779 = vmatprep.subr.bf16.mxu0 0
        %780 = vmatpush1.bf16.xpose.msra.mxu0 0
        %781 = vmatprep.subr.bf16.mxu0 0
        %782 = vmatpush1.bf16.xpose.msra.mxu0 0
        %783 = vmatprep.subr.bf16.mxu0 0
        %784 = vmatpush1.bf16.xpose.msra.mxu0 0
        %785 = vmatprep.subr.bf16.mxu0 0
        %786 = vmatpush1.bf16.xpose.msra.mxu0 0
        %787 = vmatprep.subr.bf16.mxu0 0
        %788 = vmatpush1.bf16.xpose.msra.mxu0 0
        %789 = vmatprep.subr.bf16.mxu0 0
        %790 = vmatpush1.bf16.xpose.msra.mxu0 0
        %791 = vmatprep.subr.bf16.mxu0 0
        %792 = vmatpush1.bf16.xpose.msra.mxu0 0
        %793 = vmatprep.subr.bf16.mxu0 0
        %794 = vmatpush1.bf16.xpose.msra.mxu0 0
        %795 = vmatprep.subr.bf16.mxu0 0
        %796 = vmatpush1.bf16.xpose.msra.mxu0 0
        %797 = vmatprep.subr.bf16.mxu0 0
        %798 = vmatpush1.bf16.xpose.msra.mxu0 0
        %799 = vmatprep.subr.bf16.mxu0 0
        %800 = vmatpush1.bf16.xpose.msra.mxu0 0
        %801 = vmatprep.subr.bf16.mxu0 0
        %802 = vmatpush1.bf16.xpose.msra.mxu0 0
        %803 = vmatprep.subr.bf16.mxu0 0
        %804 = vmatpush1.bf16.xpose.msra.mxu0 0
        %805 = vmatprep.subr.bf16.mxu0 0
        %806 = vmatpush1.bf16.xpose.msra.mxu0 0
        %807 = vmatprep.mubr.bf16.mxu0 0
        %808 = vmatmul.mubr.bf16.gmra.mrb[0].mxu0 %v770
        %v809 = vpop.f32.mrb[0].mxu0
        %v810 = vadd.f32 0.0, %v809
        %v811 = vpop.f32.mrb[0].mxu0
        %v812 = vpop.f32.mrb[0].mxu0
        %v813 = vpop.f32.mrb[0].mxu0
        %814 = vdwg.mxu0
        %v815 = vsel %vm655, %v810, -inf
        %816 = vmax.xlane.f32.xlu0 %v815
        %v817 = vpop.xlane.xlu0 %816
        %v818 = vsub.f32 %v810, %v817
        %v819 = vmul.f32 %v818, 1.442695
        %v820 = vpow.pop %v819
        %v821 = vsel %vm655, %v820, 0.0
        %822 = vadd.xlane.f32.xlu0 %v821
        %v823 = vpop.xlane.xlu0 %822
        %v824 = vrcp.pop %v823
        %v825 = vmul.f32 %v820, %v824
        %v826 = vpack.c.bf16 %v825, %v825
        %828 = vrot.lane.b32.xlu0 %v654, 120
        %v829 = vpop.permute.xlu0 %828
        %v831 = vsel %vm655, %v826, 0
        %v834 = vsel %vm717, %v829, 0
        %836 = vmatprep.subr.bf16.mxu0 0
        %837 = vmatpush1.bf16.msra.mxu0 %v834
        %838 = vmatprep.subr.bf16.mxu0 0
        %839 = vmatpush1.bf16.msra.mxu0 0
        %840 = vmatprep.subr.bf16.mxu0 0
        %841 = vmatpush1.bf16.msra.mxu0 0
        %842 = vmatprep.subr.bf16.mxu0 0
        %843 = vmatpush1.bf16.msra.mxu0 0
        %844 = vmatprep.subr.bf16.mxu0 0
        %845 = vmatpush1.bf16.msra.mxu0 0
        %846 = vmatprep.subr.bf16.mxu0 0
        %847 = vmatpush1.bf16.msra.mxu0 0
        %848 = vmatprep.subr.bf16.mxu0 0
        %849 = vmatpush1.bf16.msra.mxu0 0
        %850 = vmatprep.subr.bf16.mxu0 0
        %851 = vmatpush1.bf16.msra.mxu0 0
        %852 = vmatprep.subr.bf16.mxu0 0
        %853 = vmatpush1.bf16.msra.mxu0 0
        %854 = vmatprep.subr.bf16.mxu0 0
        %855 = vmatpush1.bf16.msra.mxu0 0
        %856 = vmatprep.subr.bf16.mxu0 0
        %857 = vmatpush1.bf16.msra.mxu0 0
        %858 = vmatprep.subr.bf16.mxu0 0
        %859 = vmatpush1.bf16.msra.mxu0 0
        %860 = vmatprep.subr.bf16.mxu0 0
        %861 = vmatpush1.bf16.msra.mxu0 0
        %862 = vmatprep.subr.bf16.mxu0 0
        %863 = vmatpush1.bf16.msra.mxu0 0
        %864 = vmatprep.subr.bf16.mxu0 0
        %865 = vmatpush1.bf16.msra.mxu0 0
        %866 = vmatprep.subr.bf16.mxu0 0
        %867 = vmatpush1.bf16.msra.mxu0 0
        %868 = vmatprep.mubr.bf16.mxu0 0
        %869 = vmatmul.mubr.bf16.gmra.mrb[0].mxu0 %v831
        %v870 = vpop.f32.mrb[0].mxu0
        %v871 = vadd.f32 0.0, %v870
        %v872 = vpop.f32.mrb[0].mxu0
        %v873 = vpop.f32.mrb[0].mxu0
        %v874 = vpop.f32.mrb[0].mxu0
        %875 = vdwg.mxu0
        %v876 = vpack.c.bf16 %v871, %v871
        %v877 = vld [vmem:[#allocation14 + $0x4] sm:$0xf]
        %v879 = vsel %vm655, %v876, 0
        %v882 = vsel %vm717, %v877, 0
        %884 = vmatprep.subr.bf16.mxu0 0
        %885 = vmatpush1.bf16.msra.mxu0 %v882
        %886 = vmatprep.subr.bf16.mxu0 0
        %887 = vmatpush1.bf16.msra.mxu0 0
        %888 = vmatprep.subr.bf16.mxu0 0
        %889 = vmatpush1.bf16.msra.mxu0 0
        %890 = vmatprep.subr.bf16.mxu0 0
        %891 = vmatpush1.bf16.msra.mxu0 0
        %892 = vmatprep.subr.bf16.mxu0 0
        %893 = vmatpush1.bf16.msra.mxu0 0
        %894 = vmatprep.subr.bf16.mxu0 0
        %895 = vmatpush1.bf16.msra.mxu0 0
        %896 = vmatprep.subr.bf16.mxu0 0
        %897 = vmatpush1.bf16.msra.mxu0 0
        %898 = vmatprep.subr.bf16.mxu0 0
        %899 = vmatpush1.bf16.msra.mxu0 0
        %900 = vmatprep.subr.bf16.mxu0 0
        %901 = vmatpush1.bf16.msra.mxu0 0
        %902 = vmatprep.subr.bf16.mxu0 0
        %903 = vmatpush1.bf16.msra.mxu0 0
        %904 = vmatprep.subr.bf16.mxu0 0
        %905 = vmatpush1.bf16.msra.mxu0 0
        %906 = vmatprep.subr.bf16.mxu0 0
        %907 = vmatpush1.bf16.msra.mxu0 0
        %908 = vmatprep.subr.bf16.mxu0 0
        %909 = vmatpush1.bf16.msra.mxu0 0
        %910 = vmatprep.subr.bf16.mxu0 0
        %911 = vmatpush1.bf16.msra.mxu0 0
        %912 = vmatprep.subr.bf16.mxu0 0
        %913 = vmatpush1.bf16.msra.mxu0 0
        %914 = vmatprep.subr.bf16.mxu0 0
        %915 = vmatpush1.bf16.msra.mxu0 0
        %916 = vmatprep.mubr.bf16.mxu0 0
        %917 = vmatmul.mubr.bf16.gmra.mrb[0].mxu0 %v879
        %v918 = vpop.f32.mrb[0].mxu0
        %v919 = vadd.f32 0.0, %v918
        %v920 = vpop.f32.mrb[0].mxu0
        %v921 = vpop.f32.mrb[0].mxu0
        %v922 = vpop.f32.mrb[0].mxu0
        %923 = vdwg.mxu0
        %v925 = vsel %vm655, %v761, 0
        %v928 = vsel %vm717, %v762, 0
        %930 = vmatprep.subr.bf16.mxu0 0
        %931 = vmatpush1.bf16.msra.mxu0 %v928
        %932 = vmatprep.subr.bf16.mxu0 0
        %933 = vmatpush1.bf16.msra.mxu0 0
        %934 = vmatprep.subr.bf16.mxu0 0
        %935 = vmatpush1.bf16.msra.mxu0 0
        %936 = vmatprep.subr.bf16.mxu0 0
        %937 = vmatpush1.bf16.msra.mxu0 0
        %938 = vmatprep.subr.bf16.mxu0 0
        %939 = vmatpush1.bf16.msra.mxu0 0
        %940 = vmatprep.subr.bf16.mxu0 0
        %941 = vmatpush1.bf16.msra.mxu0 0
        %942 = vmatprep.subr.bf16.mxu0 0
        %943 = vmatpush1.bf16.msra.mxu0 0
        %944 = vmatprep.subr.bf16.mxu0 0
        %945 = vmatpush1.bf16.msra.mxu0 0
        %946 = vmatprep.subr.bf16.mxu0 0
        %947 = vmatpush1.bf16.msra.mxu0 0
        %948 = vmatprep.subr.bf16.mxu0 0
        %949 = vmatpush1.bf16.msra.mxu0 0
        %950 = vmatprep.subr.bf16.mxu0 0
        %951 = vmatpush1.bf16.msra.mxu0 0
        %952 = vmatprep.subr.bf16.mxu0 0
        %953 = vmatpush1.bf16.msra.mxu0 0
        %954 = vmatprep.subr.bf16.mxu0 0
        %955 = vmatpush1.bf16.msra.mxu0 0
        %956 = vmatprep.subr.bf16.mxu0 0
        %957 = vmatpush1.bf16.msra.mxu0 0
        %958 = vmatprep.subr.bf16.mxu0 0
        %959 = vmatpush1.bf16.msra.mxu0 0
        %960 = vmatprep.subr.bf16.mxu0 0
        %961 = vmatpush1.bf16.msra.mxu0 0
        %962 = vmatprep.mubr.bf16.mxu0 0
        %963 = vmatmul.mubr.bf16.gmra.mrb[0].mxu0 %v925
        %v964 = vpop.f32.mrb[0].mxu0
        %v965 = vadd.f32 %v919, %v964
        %v966 = vpop.f32.mrb[0].mxu0
        %v967 = vpop.f32.mrb[0].mxu0
        %v968 = vpop.f32.mrb[0].mxu0
        %969 = vdwg.mxu0
        %970 = vrot.lane.b32.xlu0 %v526, 112
        %v971 = vpop.permute.xlu0 %970
        %972 = vrot.lane.b32.xlu0 %v590, 112
        %v973 = vpop.permute.xlu0 %972
        %v975 = vsel %vm655, %v971, 0
        %v978 = vsel %vm655, %v973, 0
        %980 = vmatprep.subr.bf16.mxu0 0
        %981 = vmatpush1.bf16.xpose.msra.mxu0 %v978
        %982 = vmatprep.subr.bf16.mxu0 0
        %983 = vmatpush1.bf16.xpose.msra.mxu0 0
        %984 = vmatprep.subr.bf16.mxu0 0
        %985 = vmatpush1.bf16.xpose.msra.mxu0 0
        %986 = vmatprep.subr.bf16.mxu0 0
        %987 = vmatpush1.bf16.xpose.msra.mxu0 0
        %988 = vmatprep.subr.bf16.mxu0 0
        %989 = vmatpush1.bf16.xpose.msra.mxu0 0
        %990 = vmatprep.subr.bf16.mxu0 0
        %991 = vmatpush1.bf16.xpose.msra.mxu0 0
        %992 = vmatprep.subr.bf16.mxu0 0
        %993 = vmatpush1.bf16.xpose.msra.mxu0 0
        %994 = vmatprep.subr.bf16.mxu0 0
        %995 = vmatpush1.bf16.xpose.msra.mxu0 0
        %996 = vmatprep.subr.bf16.mxu0 0
        %997 = vmatpush1.bf16.xpose.msra.mxu0 0
        %998 = vmatprep.subr.bf16.mxu0 0
        %999 = vmatpush1.bf16.xpose.msra.mxu0 0
        %1000 = vmatprep.subr.bf16.mxu0 0
        %1001 = vmatpush1.bf16.xpose.msra.mxu0 0
        %1002 = vmatprep.subr.bf16.mxu0 0
        %1003 = vmatpush1.bf16.xpose.msra.mxu0 0
        %1004 = vmatprep.subr.bf16.mxu0 0
        %1005 = vmatpush1.bf16.xpose.msra.mxu0 0
        %1006 = vmatprep.subr.bf16.mxu0 0
        %1007 = vmatpush1.bf16.xpose.msra.mxu0 0
        %1008 = vmatprep.subr.bf16.mxu0 0
        %1009 = vmatpush1.bf16.xpose.msra.mxu0 0
        %1010 = vmatprep.subr.bf16.mxu0 0
        %1011 = vmatpush1.bf16.xpose.msra.mxu0 0
        %1012 = vmatprep.mubr.bf16.mxu0 0
        %1013 = vmatmul.mubr.bf16.gmra.mrb[0].mxu0 %v975
        %v1014 = vpop.f32.mrb[0].mxu0
        %v1015 = vadd.f32 0.0, %v1014
        %v1016 = vpop.f32.mrb[0].mxu0
        %v1017 = vpop.f32.mrb[0].mxu0
        %v1018 = vpop.f32.mrb[0].mxu0
        %1019 = vdwg.mxu0
        %v1020 = vsel %vm655, %v1015, -inf
        %1021 = vmax.xlane.f32.xlu0 %v1020
        %v1022 = vpop.xlane.xlu0 %1021
        %v1023 = vsub.f32 %v1015, %v1022
        %v1024 = vmul.f32 %v1023, 1.442695
        %v1025 = vpow.pop %v1024
        %v1026 = vsel %vm655, %v1025, 0.0
        %1027 = vadd.xlane.f32.xlu0 %v1026
        %v1028 = vpop.xlane.xlu0 %1027
        %v1029 = vrcp.pop %v1028
        %v1030 = vmul.f32 %v1025, %v1029
        %v1031 = vpack.c.bf16 %v1030, %v1030
        %1032 = vrot.lane.b32.xlu0 %v654, 112
        %v1033 = vpop.permute.xlu0 %1032
        %v1035 = vsel %vm655, %v1031, 0
        %v1038 = vsel %vm717, %v1033, 0
        %1040 = vmatprep.subr.bf16.mxu0 0
        %1041 = vmatpush1.bf16.msra.mxu0 %v1038
        %1042 = vmatprep.subr.bf16.mxu0 0
        %1043 = vmatpush1.bf16.msra.mxu0 0
        %1044 = vmatprep.subr.bf16.mxu0 0
        %1045 = vmatpush1.bf16.msra.mxu0 0
        %1046 = vmatprep.subr.bf16.mxu0 0
        %1047 = vmatpush1.bf16.msra.mxu0 0
        %1048 = vmatprep.subr.bf16.mxu0 0
        %1049 = vmatpush1.bf16.msra.mxu0 0
        %1050 = vmatprep.subr.bf16.mxu0 0
        %1051 = vmatpush1.bf16.msra.mxu0 0
        %1052 = vmatprep.subr.bf16.mxu0 0
        %1053 = vmatpush1.bf16.msra.mxu0 0
        %1054 = vmatprep.subr.bf16.mxu0 0
        %1055 = vmatpush1.bf16.msra.mxu0 0
        %1056 = vmatprep.subr.bf16.mxu0 0
        %1057 = vmatpush1.bf16.msra.mxu0 0
        %1058 = vmatprep.subr.bf16.mxu0 0
        %1059 = vmatpush1.bf16.msra.mxu0 0
        %1060 = vmatprep.subr.bf16.mxu0 0
        %1061 = vmatpush1.bf16.msra.mxu0 0
        %1062 = vmatprep.subr.bf16.mxu0 0
        %1063 = vmatpush1.bf16.msra.mxu0 0
        %1064 = vmatprep.subr.bf16.mxu0 0
        %1065 = vmatpush1.bf16.msra.mxu0 0
        %1066 = vmatprep.subr.bf16.mxu0 0
        %1067 = vmatpush1.bf16.msra.mxu0 0
        %1068 = vmatprep.subr.bf16.mxu0 0
        %1069 = vmatpush1.bf16.msra.mxu0 0
        %1070 = vmatprep.subr.bf16.mxu0 0
        %1071 = vmatpush1.bf16.msra.mxu0 0
        %1072 = vmatprep.mubr.bf16.mxu0 0
        %1073 = vmatmul.mubr.bf16.gmra.mrb[0].mxu0 %v1035
        %v1074 = vpop.f32.mrb[0].mxu0
        %v1075 = vadd.f32 0.0, %v1074
        %v1076 = vpop.f32.mrb[0].mxu0
        %v1077 = vpop.f32.mrb[0].mxu0
        %v1078 = vpop.f32.mrb[0].mxu0
        %1079 = vdwg.mxu0
        %v1080 = vpack.c.bf16 %v1075, %v1075
        %v1081 = vld [vmem:[#allocation14 + $0x8] sm:$0xf]
        %v1083 = vsel %vm655, %v1080, 0
        %v1086 = vsel %vm717, %v1081, 0
        %1088 = vmatprep.subr.bf16.mxu0 0
        %1089 = vmatpush1.bf16.msra.mxu0 %v1086
        %1090 = vmatprep.subr.bf16.mxu0 0
        %1091 = vmatpush1.bf16.msra.mxu0 0
        %1092 = vmatprep.subr.bf16.mxu0 0
        %1093 = vmatpush1.bf16.msra.mxu0 0
        %1094 = vmatprep.subr.bf16.mxu0 0
        %1095 = vmatpush1.bf16.msra.mxu0 0
        %1096 = vmatprep.subr.bf16.mxu0 0
        %1097 = vmatpush1.bf16.msra.mxu0 0
        %1098 = vmatprep.subr.bf16.mxu0 0
        %1099 = vmatpush1.bf16.msra.mxu0 0
        %1100 = vmatprep.subr.bf16.mxu0 0
        %1101 = vmatpush1.bf16.msra.mxu0 0
        %1102 = vmatprep.subr.bf16.mxu0 0
        %1103 = vmatpush1.bf16.msra.mxu0 0
        %1104 = vmatprep.subr.bf16.mxu0 0
        %1105 = vmatpush1.bf16.msra.mxu0 0
        %1106 = vmatprep.subr.bf16.mxu0 0
        %1107 = vmatpush1.bf16.msra.mxu0 0
        %1108 = vmatprep.subr.bf16.mxu0 0
        %1109 = vmatpush1.bf16.msra.mxu0 0
        %1110 = vmatprep.subr.bf16.mxu0 0
        %1111 = vmatpush1.bf16.msra.mxu0 0
        %1112 = vmatprep.subr.bf16.mxu0 0
        %1113 = vmatpush1.bf16.msra.mxu0 0
        %1114 = vmatprep.subr.bf16.mxu0 0
        %1115 = vmatpush1.bf16.msra.mxu0 0
        %1116 = vmatprep.subr.bf16.mxu0 0
        %1117 = vmatpush1.bf16.msra.mxu0 0
        %1118 = vmatprep.subr.bf16.mxu0 0
        %1119 = vmatpush1.bf16.msra.mxu0 0
        %1120 = vmatprep.mubr.bf16.mxu0 0
        %1121 = vmatmul.mubr.bf16.gmra.mrb[0].mxu0 %v1083
        %v1122 = vpop.f32.mrb[0].mxu0
        %v1123 = vadd.f32 0.0, %v1122
        %v1124 = vpop.f32.mrb[0].mxu0
        %v1125 = vpop.f32.mrb[0].mxu0
        %v1126 = vpop.f32.mrb[0].mxu0
        %1127 = vdwg.mxu0
        %v1128 = vadd.f32 %v965, %v1123
        %1129 = vrot.lane.b32.xlu0 %v526, 104
        %v1130 = vpop.permute.xlu0 %1129
        %1131 = vrot.lane.b32.xlu0 %v590, 104
        %v1132 = vpop.permute.xlu0 %1131
        %v1134 = vsel %vm655, %v1130, 0
        %v1137 = vsel %vm655, %v1132, 0
        %1139 = vmatprep.subr.bf16.mxu0 0
        %1140 = vmatpush1.bf16.xpose.msra.mxu0 %v1137
        %1141 = vmatprep.subr.bf16.mxu0 0
        %1142 = vmatpush1.bf16.xpose.msra.mxu0 0
        %1143 = vmatprep.subr.bf16.mxu0 0
        %1144 = vmatpush1.bf16.xpose.msra.mxu0 0
        %1145 = vmatprep.subr.bf16.mxu0 0
        %1146 = vmatpush1.bf16.xpose.msra.mxu0 0
        %1147 = vmatprep.subr.bf16.mxu0 0
        %1148 = vmatpush1.bf16.xpose.msra.mxu0 0
        %1149 = vmatprep.subr.bf16.mxu0 0
        %1150 = vmatpush1.bf16.xpose.msra.mxu0 0
        %1151 = vmatprep.subr.bf16.mxu0 0
        %1152 = vmatpush1.bf16.xpose.msra.mxu0 0
        %1153 = vmatprep.subr.bf16.mxu0 0
        %1154 = vmatpush1.bf16.xpose.msra.mxu0 0
        %1155 = vmatprep.subr.bf16.mxu0 0
        %1156 = vmatpush1.bf16.xpose.msra.mxu0 0
        %1157 = vmatprep.subr.bf16.mxu0 0
        %1158 = vmatpush1.bf16.xpose.msra.mxu0 0
        %1159 = vmatprep.subr.bf16.mxu0 0
        %1160 = vmatpush1.bf16.xpose.msra.mxu0 0
        %1161 = vmatprep.subr.bf16.mxu0 0
        %1162 = vmatpush1.bf16.xpose.msra.mxu0 0
        %1163 = vmatprep.subr.bf16.mxu0 0
        %1164 = vmatpush1.bf16.xpose.msra.mxu0 0
        %1165 = vmatprep.subr.bf16.mxu0 0
        %1166 = vmatpush1.bf16.xpose.msra.mxu0 0
        %1167 = vmatprep.subr.bf16.mxu0 0
        %1168 = vmatpush1.bf16.xpose.msra.mxu0 0
        %1169 = vmatprep.subr.bf16.mxu0 0
        %1170 = vmatpush1.bf16.xpose.msra.mxu0 0
        %1171 = vmatprep.mubr.bf16.mxu0 0
        %1172 = vmatmul.mubr.bf16.gmra.mrb[0].mxu0 %v1134
        %v1173 = vpop.f32.mrb[0].mxu0
        %v1174 = vadd.f32 0.0, %v1173
        %v1175 = vpop.f32.mrb[0].mxu0
        %v1176 = vpop.f32.mrb[0].mxu0
        %v1177 = vpop.f32.mrb[0].mxu0
        %1178 = vdwg.mxu0
        %v1179 = vsel %vm655, %v1174, -inf
        %1180 = vmax.xlane.f32.xlu0 %v1179
        %v1181 = vpop.xlane.xlu0 %1180
        %v1182 = vsub.f32 %v1174, %v1181
        %v1183 = vmul.f32 %v1182, 1.442695
        %v1184 = vpow.pop %v1183
        %v1185 = vsel %vm655, %v1184, 0.0
        %1186 = vadd.xlane.f32.xlu0 %v1185
        %v1187 = vpop.xlane.xlu0 %1186
        %v1188 = vrcp.pop %v1187
        %v1189 = vmul.f32 %v1184, %v1188
        %v1190 = vpack.c.bf16 %v1189, %v1189
        %1191 = vrot.lane.b32.xlu0 %v654, 104
        %v1192 = vpop.permute.xlu0 %1191
        %v1194 = vsel %vm655, %v1190, 0
        %v1197 = vsel %vm717, %v1192, 0
        %1199 = vmatprep.subr.bf16.mxu0 0
        %1200 = vmatpush1.bf16.msra.mxu0 %v1197
        %1201 = vmatprep.subr.bf16.mxu0 0
        %1202 = vmatpush1.bf16.msra.mxu0 0
        %1203 = vmatprep.subr.bf16.mxu0 0
        %1204 = vmatpush1.bf16.msra.mxu0 0
        %1205 = vmatprep.subr.bf16.mxu0 0
        %1206 = vmatpush1.bf16.msra.mxu0 0
        %1207 = vmatprep.subr.bf16.mxu0 0
        %1208 = vmatpush1.bf16.msra.mxu0 0
        %1209 = vmatprep.subr.bf16.mxu0 0
        %1210 = vmatpush1.bf16.msra.mxu0 0
        %1211 = vmatprep.subr.bf16.mxu0 0
        %1212 = vmatpush1.bf16.msra.mxu0 0
        %1213 = vmatprep.subr.bf16.mxu0 0
        %1214 = vmatpush1.bf16.msra.mxu0 0
        %1215 = vmatprep.subr.bf16.mxu0 0
        %1216 = vmatpush1.bf16.msra.mxu0 0
        %1217 = vmatprep.subr.bf16.mxu0 0
        %1218 = vmatpush1.bf16.msra.mxu0 0
        %1219 = vmatprep.subr.bf16.mxu0 0
        %1220 = vmatpush1.bf16.msra.mxu0 0
        %1221 = vmatprep.subr.bf16.mxu0 0
        %1222 = vmatpush1.bf16.msra.mxu0 0
        %1223 = vmatprep.subr.bf16.mxu0 0
        %1224 = vmatpush1.bf16.msra.mxu0 0
        %1225 = vmatprep.subr.bf16.mxu0 0
        %1226 = vmatpush1.bf16.msra.mxu0 0
        %1227 = vmatprep.subr.bf16.mxu0 0
        %1228 = vmatpush1.bf16.msra.mxu0 0
        %1229 = vmatprep.subr.bf16.mxu0 0
        %1230 = vmatpush1.bf16.msra.mxu0 0
        %1231 = vmatprep.mubr.bf16.mxu0 0
        %1232 = vmatmul.mubr.bf16.gmra.mrb[0].mxu0 %v1194
        %v1233 = vpop.f32.mrb[0].mxu0
        %v1234 = vadd.f32 0.0, %v1233
        %v1235 = vpop.f32.mrb[0].mxu0
        %v1236 = vpop.f32.mrb[0].mxu0
        %v1237 = vpop.f32.mrb[0].mxu0
        %1238 = vdwg.mxu0
        %v1239 = vpack.c.bf16 %v1234, %v1234
        %v1240 = vld [vmem:[#allocation14 + $0xc] sm:$0xf]
        %v1242 = vsel %vm655, %v1239, 0
        %v1245 = vsel %vm717, %v1240, 0
        %1247 = vmatprep.subr.bf16.mxu0 0
        %1248 = vmatpush1.bf16.msra.mxu0 %v1245
        %1249 = vmatprep.subr.bf16.mxu0 0
        %1250 = vmatpush1.bf16.msra.mxu0 0
        %1251 = vmatprep.subr.bf16.mxu0 0
        %1252 = vmatpush1.bf16.msra.mxu0 0
        %1253 = vmatprep.subr.bf16.mxu0 0
        %1254 = vmatpush1.bf16.msra.mxu0 0
        %1255 = vmatprep.subr.bf16.mxu0 0
        %1256 = vmatpush1.bf16.msra.mxu0 0
        %1257 = vmatprep.subr.bf16.mxu0 0
        %1258 = vmatpush1.bf16.msra.mxu0 0
        %1259 = vmatprep.subr.bf16.mxu0 0
        %1260 = vmatpush1.bf16.msra.mxu0 0
        %1261 = vmatprep.subr.bf16.mxu0 0
        %1262 = vmatpush1.bf16.msra.mxu0 0
        %1263 = vmatprep.subr.bf16.mxu0 0
        %1264 = vmatpush1.bf16.msra.mxu0 0
        %1265 = vmatprep.subr.bf16.mxu0 0
        %1266 = vmatpush1.bf16.msra.mxu0 0
        %1267 = vmatprep.subr.bf16.mxu0 0
        %1268 = vmatpush1.bf16.msra.mxu0 0
        %1269 = vmatprep.subr.bf16.mxu0 0
        %1270 = vmatpush1.bf16.msra.mxu0 0
        %1271 = vmatprep.subr.bf16.mxu0 0
        %1272 = vmatpush1.bf16.msra.mxu0 0
        %1273 = vmatprep.subr.bf16.mxu0 0
        %1274 = vmatpush1.bf16.msra.mxu0 0
        %1275 = vmatprep.subr.bf16.mxu0 0
        %1276 = vmatpush1.bf16.msra.mxu0 0
        %1277 = vmatprep.subr.bf16.mxu0 0
        %1278 = vmatpush1.bf16.msra.mxu0 0
        %1279 = vmatprep.mubr.bf16.mxu0 0
        %1280 = vmatmul.mubr.bf16.gmra.mrb[0].mxu0 %v1242
        %v1281 = vpop.f32.mrb[0].mxu0
        %v1282 = vadd.f32 0.0, %v1281
        %v1283 = vpop.f32.mrb[0].mxu0
        %v1284 = vpop.f32.mrb[0].mxu0
        %v1285 = vpop.f32.mrb[0].mxu0
        %1286 = vdwg.mxu0
        %v1287 = vadd.f32 %v1128, %v1282
        %v1288 = vld [vmem:[#allocation16] sm:$0x1]
        %v1290 = vlaneseq
        %v1291 = vshrl.u32 %v1290, 7
        %v1292 = vsub.s32 0, %v1291
        %v1293 = vrot.slane %v1288, %v1292
        %v1295 = vadd.f32 %v1287, %v1293
        %1296 = vst.msk [vmem:[%s455] sm:$0xff] %vm482, %v1295
        %s1297 = sand.u32 %s232, 1
        %s1298 = scalar_lea.sflag [#allocation4], %s1297
        %s1299 = sand.u32 %s232, 1
        %s1300 = smul.addr %s1299, 8
        %s1301 = scalar_lea.vmem [#allocation17], %s1300
        // Predicated region
        $region93: #{tpu_custom_call.1} parent=55 // pred_check
          %p1302 = pneg %p242
        $region94: #{tpu_custom_call.1} parent=55 // pred_check_branch
          %1304 = sbr.rel (%p1302) target = $region96
        $region95: #{tpu_custom_call.1} parent=55 // pred_region
          %s1306 = ssub.s32 128, 128
          %1307 = vsyncadd %s1298, %s1306
          %s1308 = smul.addr %s30, 128
          %s1309 = scalar_lea.hbm %s9, %s1308
          %s1311 = sshll.u32 %s1301, 4
          %s1312 = int_to_ptr.vmem [resolvable:$true] %s1311
          %1314 = dma.vmem_to_hbm [thread:$0]  %s1312, 128, %s1309, %s1298
        $region96: #{tpu_custom_call.1} parent=55 // pred_fallthru
          _
      $region56: #{tpu_custom_call.1} parent=5 // pred_fallthru
        _
      %p1315 = scmp.le.s32.totalorder 2, %s25
      // Predicated region
      $region97: #{tpu_custom_call.1} parent=5 // pred_check
        %p1316 = pneg %p1315
      $region98: #{tpu_custom_call.1} parent=5 // pred_check_branch
        %1318 = sbr.rel (%p1316) target = $region100
      $region99: #{tpu_custom_call.1} parent=5 // pred_region
        %s1319 = ssub.s32 %s25, 2
        // Predicated region
        $region101: #{tpu_custom_call.1} parent=99 // pred_check
          %p1320 = pneg %p248
        $region102: #{tpu_custom_call.1} parent=99 // pred_check_branch
          %1322 = sbr.rel (%p1320) target = $region104
        $region103: #{tpu_custom_call.1} parent=99 // pred_region
          %s1323 = sand.u32 %s233, 1
          %s1324 = scalar_lea.sflag [#allocation4], %s1323
          %s1325 = sand.u32 %s233, 1
          %s1326 = smul.addr %s1325, 8
          %s1327 = scalar_lea.vmem [#allocation17], %s1326
          %1328 = dma.done %s1324, 128
        $region104: #{tpu_custom_call.1} parent=99 // pred_fallthru
          _
      $region100: #{tpu_custom_call.1} parent=5 // pred_fallthru
        _
    $region6: #{tpu_custom_call.1} parent=1 // loop_footer
      %s29 = sadd.s32 1, %s25
    $region7: #{tpu_custom_call.1} parent=1 // loop_footer_branch
      %24 = sbr.rel target = $region3
    $region8: #{tpu_custom_call.1} parent=1 // loop_exit
      _
    %1329 = vsyncpa [#allocation3], 1
    %s1330 = scalar_lea.sflag [#allocation3], 1
    %1331 = vsyncpa %s1330, 1
    %1332 = vsyncpa [#allocation6], 1
    %1333 = vsyncpa [#allocation9], 1
    %1334 = vsyncpa [#allocation12], 1
    %1335 = vsyncpa [#allocation15], 1
    %1336 = vsyncpa [#allocation4], 1
    %s1337 = scalar_lea.sflag [#allocation4], 1
    %1338 = vsyncpa %s1337, 1

</llo_original>
